<compile_context>
chip_gen: v6e
topology: v6e:2x2x1
jax: 0.10.0
libtpu: 0.0.40
codegen_flags: <defaults>
</compile_context>

<pallas_src>
import functools

import jax
import jax.numpy as jnp
import numpy as np
from jax import lax
from jax.experimental import pallas as pl
from jax.experimental.pallas import tpu as pltpu


def _round_up(x, m):
    return ((x + m - 1) // m) * m


# ----------------------------------------------------------------------------- kernel
def _attn_decoder_kernel(
    # inputs (all VMEM unless noted)
    enc_ref,            # (B, Pp, E)  encoder features, pixel axis zero-padded to Pp
    att1_ref,           # (B, Pp, A)  hoisted encoder attention projection (enc @ w_ea + b_ea)
    xproj_ref,          # (T, B, 4D)  pre-GEMMed LSTM input projection (emb @ w_xm + b_x + b_hh)
    bt_ref,             # (T,) int32  SMEM: number of active rows at step t (PyTorch batch_size_t)
    w_da_ref, b_da_ref,  # decoder_att : (D, A), (1, A)
    w_fa_ref, b_fa_ref,  # full_att    : (1, A) row vector, (1, 1)
    w_ih_ref, b_ih_ref,  # init_h      : (E, D), (1, D)
    w_ic_ref, b_ic_ref,  # init_c      : (E, D), (1, D)
    w_fb_ref, b_fb_ref,  # f_beta      : (D, E), (1, E)
    w_xe_ref,            # LSTM input weights (attention part): (E, 4D)
    w_hh_ref,            # LSTM hidden weights: (D, 4D)
    w_fc_ref, b_fc_ref,  # fc (vocab-padded): (D, Vp), (1, Vp)
    # outputs
    preds_ref,          # (T, B, Vp)
    alphas_ref,         # (T, B, Pp)
    # scratch
    h_scr, c_scr,       # VMEM (B, D) recurrent state
    *, num_pixels,
):
    T = preds_ref.shape[0]
    B, Pp, _E = enc_ref.shape
    D = h_scr.shape[1]
    f32 = jnp.float32

    # ---- init_hidden_state (runs once): mean over real pixels -> two linears ----
    inv_p = 1.0 / float(num_pixels)
    mean_enc = jnp.sum(enc_ref[...], axis=1) * inv_p                              # (B, E); pads are 0
    h_scr[...] = jnp.dot(mean_enc, w_ih_ref[...], preferred_element_type=f32) + b_ih_ref[...]
    c_scr[...] = jnp.dot(mean_enc, w_ic_ref[...], preferred_element_type=f32) + b_ic_ref[...]

    # Loop-invariant masks (hoisted broadcasts).
    batch_iota = lax.broadcasted_iota(jnp.int32, (B, 1), 0)                       # (B, 1)
    pix_valid = lax.broadcasted_iota(jnp.int32, (1, Pp), 1) < num_pixels          # (1, Pp)

    # ---- recurrent loop over time, fully inside one kernel invocation ----
    @pl.loop(0, T)
    def _step(t):
        h = h_scr[...]                                                            # (B, D)
        c = c_scr[...]                                                            # (B, D)

        # Attention (att1 is precomputed / loop-invariant).
        att2 = jnp.dot(h, w_da_ref[...], preferred_element_type=f32) + b_da_ref[...]       # (B, A)
        att = jnp.maximum(att1_ref[...] + att2[:, None, :], 0.0)                           # (B, Pp, A)
        # full_att: 1-wide projection done on the VPU (multiply + lane reduce), not a 1-col MXU op.
        e = jnp.sum(att * w_fa_ref[...], axis=-1) + b_fa_ref[...]                          # (B, Pp)
        e = jnp.where(pix_valid, e, -1e30)                                                 # mask pad pixels
        e_max = jnp.max(e, axis=1, keepdims=True)
        p = jnp.exp(e - e_max)
        alpha = p / jnp.sum(p, axis=1, keepdims=True)                                      # (B, Pp)
        # Weighted encoding: padded pixels contribute exactly 0 (alpha==0 and enc pad rows == 0).
        awe = jnp.sum(enc_ref[...] * alpha[:, :, None], axis=1)                            # (B, E)

        # gate = sigmoid(f_beta(h))
        gate = jax.nn.sigmoid(jnp.dot(h, w_fb_ref[...], preferred_element_type=f32) + b_fb_ref[...])
        awe = gate * awe

        # LSTMCell([emb_t, awe], (h, c)); the emb_t @ w_xm + b_x + b_hh part is pre-GEMMed (xproj).
        gates = (xproj_ref[t]
                 + jnp.dot(awe, w_xe_ref[...], preferred_element_type=f32)
                 + jnp.dot(h, w_hh_ref[...], preferred_element_type=f32))                  # (B, 4D)
        i_g = jax.nn.sigmoid(gates[:, 0:D])
        f_g = jax.nn.sigmoid(gates[:, D:2 * D])
        g_g = jnp.tanh(gates[:, 2 * D:3 * D])
        o_g = jax.nn.sigmoid(gates[:, 3 * D:4 * D])
        c_new = f_g * c + i_g * g_g
        h_new = o_g * jnp.tanh(c_new)

        # fc head (vocab padded to Vp lanes).
        # TODO(synk): torch.nn.Dropout(p=0.1) treated as identity (eval-mode / inference semantics).
        preds = jnp.dot(h_new, w_fc_ref[...], preferred_element_type=f32) + b_fc_ref[...]  # (B, Vp)

        # Only the first batch_size_t rows are written (PyTorch shrinking-batch semantics for
        # descending-sorted lengths); inactive rows are written as zero.
        active = batch_iota < bt_ref[t]                                                    # (B, 1)
        preds_ref[t] = jnp.where(active, preds, 0.0)
        alphas_ref[t] = jnp.where(active, alpha, 0.0)

        h_scr[...] = h_new
        c_scr[...] = c_new


# ----------------------------------------------------------------------------- wrapper
def attn_decoder_forward(params, encoder_out, encoded_captions, caption_lengths):
    """Pallas implementation of AttnDecoderRNN.forward.

    Returns (predictions, encoded_captions, decode_lengths, alphas) exactly like PyTorch.
    """
    B = encoder_out.shape[0]
    E = encoder_out.shape[-1]
    enc = encoder_out.reshape(B, -1, E).astype(jnp.float32)            # (B, P, E)
    P = enc.shape[1]

    decode_lengths = [int(l) - 1 for l in caption_lengths]
    T = max(decode_lengths)

    emb_table = params["embedding"]                                    # (V, M)
    M = emb_table.shape[1]
    D = params["w_hh"].shape[0]
    A = params["w_ea"].shape[1]
    V = params["w_fc"].shape[1]

    Pp = _round_up(P, 128)                                             # lane-dense pixel axis
    Vp = _round_up(V, 128)                                             # lane-dense vocab axis

    # Zero-pad encoder features along the pixel axis.
    enc_p = jnp.zeros((B, Pp, E), jnp.float32).at[:, :P, :].set(enc)

    # Loop-invariant encoder attention projection: one flat 2-D GEMM, hoisted out of the recurrence.
    att1_p = (enc_p.reshape(B * Pp, E) @ params["w_ea"] + params["b_ea"]).reshape(B, Pp, A)

    # Embedding lookup (plain JAX gather) + input-projection pre-GEMM (b_x and b_hh folded in).
    embeddings = emb_table[encoded_captions]                           # (B, L, M)
    emb_tbm = jnp.transpose(embeddings[:, :T, :], (1, 0, 2))           # (T, B, M) time-major
    xproj = (emb_tbm.reshape(T * B, M) @ params["w_xm"]
             + params["b_x"] + params["b_hh"]).reshape(T, B, 4 * D)

    # fc head padded to Vp output lanes (extra columns are exactly zero).
    w_fc_p = jnp.zeros((D, Vp), jnp.float32).at[:, :V].set(params["w_fc"])
    b_fc_p = jnp.zeros((1, Vp), jnp.float32).at[:, :V].set(params["b_fc"])

    # full_att weight as a (1, A) row for the VPU multiply+reduce path.
    w_fa_row = params["w_fa"].reshape(1, A)

    # Per-step active-row counts (PyTorch batch_size_t); scalar path -> SMEM.
    bt = jnp.asarray([sum(1 for l in decode_lengths if l > t) for t in range(T)], jnp.int32)

    weight_args = [
        params["w_da"], params["b_da"],
        w_fa_row, params["b_fa"],
        params["w_ih"], params["b_ih"],
        params["w_ic"], params["b_ic"],
        params["w_fb"], params["b_fb"],
        params["w_xe"], params["w_hh"],
        w_fc_p, b_fc_p,
    ]

    def _vmem():
        return pl.BlockSpec(memory_space=pltpu.MemorySpace.VMEM)

    in_specs = (
        [_vmem(), _vmem(), _vmem(),                                    # enc_p, att1_p, xproj
         pl.BlockSpec(memory_space=pltpu.MemorySpace.SMEM)]            # bt (scalar path)
        + [_vmem() for _ in weight_args]
    )
    out_specs = (_vmem(), _vmem())

    kernel = functools.partial(_attn_decoder_kernel, num_pixels=P)

    preds_tbv, alphas_tbp = pl.pallas_call(
        kernel,
        out_shape=(jax.ShapeDtypeStruct((T, B, Vp), jnp.float32),
                   jax.ShapeDtypeStruct((T, B, Pp), jnp.float32)),
        in_specs=in_specs,
        out_specs=out_specs,
        scratch_shapes=[pltpu.VMEM((B, D), jnp.float32),               # h
                        pltpu.VMEM((B, D), jnp.float32)],              # c
    )(enc_p, att1_p, xproj, bt, *weight_args)

    predictions = jnp.transpose(preds_tbv[:, :, :V], (1, 0, 2))        # (B, T, V)
    alphas = jnp.transpose(alphas_tbp[:, :, :P], (1, 0, 2))            # (B, T, P)
    return predictions, encoded_captions, decode_lengths, alphas


# ----------------------------------------------------------------------------- parameters
def init_params(key, *, attention_dim, embed_dim, decoder_dim, vocab_size, encoder_dim):
    """Deterministic synthetic parameters (uniform(-0.1, 0.1)); fc bias zero as in init_weights()."""
    A, M, D, V, E = attention_dim, embed_dim, decoder_dim, vocab_size, encoder_dim
    names_shapes = [
        ("embedding", (V, M)),
        ("w_ea", (E, A)), ("b_ea", (1, A)),
        ("w_da", (D, A)), ("b_da", (1, A)),
        ("w_fa", (A, 1)), ("b_fa", (1, 1)),
        ("w_ih", (E, D)), ("b_ih", (1, D)),
        ("w_ic", (E, D)), ("b_ic", (1, D)),
        ("w_fb", (D, E)), ("b_fb", (1, E)),
        ("w_xm", (M, 4 * D)), ("w_xe", (E, 4 * D)), ("b_x", (1, 4 * D)),
        ("w_hh", (D, 4 * D)), ("b_hh", (1, 4 * D)),
        ("w_fc", (D, V)),
    ]
    keys = jax.random.split(key, len(names_shapes))
    params = {name: jax.random.uniform(k, shape, jnp.float32, -0.1, 0.1)
              for (name, shape), k in zip(names_shapes, keys)}
    params["b_fc"] = jnp.zeros((1, V), jnp.float32)                    # fc.bias.data.fill_(0)
    return params


# ----------------------------------------------------------------------------- pure-JAX reference
def reference_forward(params, encoder_out, encoded_captions, caption_lengths):
    B = encoder_out.shape[0]
    E = encoder_out.shape[-1]
    enc = encoder_out.reshape(B, -1, E).astype(jnp.float32)
    P = enc.shape[1]
    decode_lengths = [int(l) - 1 for l in caption_lengths]
    T = max(decode_lengths)
    dl = jnp.asarray(decode_lengths, jnp.int32)[:, None]
    D = params["w_hh"].shape[0]
    V = params["w_fc"].shape[1]

    emb = params["embedding"][encoded_captions]
    mean_enc = enc.mean(axis=1)
    h = mean_enc @ params["w_ih"] + params["b_ih"]
    c = mean_enc @ params["w_ic"] + params["b_ic"]

    preds_all = jnp.zeros((B, T, V), jnp.float32)
    alphas_all = jnp.zeros((B, T, P), jnp.float32)
    for t in range(T):
        att1 = jnp.einsum('bpe,ea->bpa', enc, params["w_ea"]) + params["b_ea"]
        att2 = h @ params["w_da"] + params["b_da"]
        att = jnp.maximum(att1 + att2[:, None, :], 0.0)
        e = (jnp.einsum('bpa,ao->bpo', att, params["w_fa"]) + params["b_fa"])[..., 0]
        alpha = jax.nn.softmax(e, axis=1)
        awe = (enc * alpha[:, :, None]).sum(axis=1)
        gate = jax.nn.sigmoid(h @ params["w_fb"] + params["b_fb"])
        awe = gate * awe
        gates = (emb[:, t, :] @ params["w_xm"] + awe @ params["w_xe"] + params["b_x"]
                 + h @ params["w_hh"] + params["b_hh"])
        i_g = jax.nn.sigmoid(gates[:, 0:D])
        f_g = jax.nn.sigmoid(gates[:, D:2 * D])
        g_g = jnp.tanh(gates[:, 2 * D:3 * D])
        o_g = jax.nn.sigmoid(gates[:, 3 * D:4 * D])
        c = f_g * c + i_g * g_g
        h = o_g * jnp.tanh(c)
        preds = h @ params["w_fc"] + params["b_fc"]
        active = (t < dl)
        preds_all = preds_all.at[:, t, :].set(jnp.where(active, preds, 0.0))
        alphas_all = alphas_all.at[:, t, :].set(jnp.where(active, alpha, 0.0))
    return preds_all, alphas_all


# ----------------------------------------------------------------------------- main
if __name__ == "__main__":
    # Small, forward-consistent shapes.
    B, H, W = 4, 4, 4                       # batch, encoder spatial (P = 16 pixels)
    E, M, D, A, V = 32, 32, 32, 32, 64      # encoder_dim, embed_dim, decoder_dim, attention_dim, vocab
    caption_lengths = [8, 7, 6, 5]          # sorted descending, as the PyTorch loop requires
    L = max(caption_lengths)

    root = jax.random.PRNGKey(0)
    k_par, k_enc, k_cap = jax.random.split(root, 3)

    params = init_params(k_par, attention_dim=A, embed_dim=M, decoder_dim=D,
                         vocab_size=V, encoder_dim=E)
    encoder_out = jax.random.normal(k_enc, (B, H, W, E), jnp.float32)
    encoded_captions = jax.random.randint(k_cap, (B, L), 0, V, jnp.int32)

    predictions, caps_out, decode_lengths, alphas = attn_decoder_forward(
        params, encoder_out, encoded_captions, caption_lengths)
    jax.block_until_ready((predictions, alphas))

    # Cross-check against a pure-JAX reference of the same math.
    ref_preds, ref_alphas = reference_forward(params, encoder_out, encoded_captions, caption_lengths)
    np.testing.assert_allclose(np.asarray(predictions), np.asarray(ref_preds), rtol=5e-3, atol=5e-3)
    np.testing.assert_allclose(np.asarray(alphas), np.asarray(ref_alphas), rtol=5e-3, atol=5e-3)

    assert predictions.shape == (B, max(decode_lengths), V)
    assert alphas.shape == (B, max(decode_lengths), H * W)
    print("KERNEL_OK")
</pallas_src>

<mosaic_0001>
module attributes {stable_mosaic.version = 11 : i64} {
  func.func @_attn_decoder_kernel(%arg0: memref<4x128x32xf32, #tpu.memory_space<vmem>>, %arg1: memref<4x128x32xf32, #tpu.memory_space<vmem>>, %arg2: memref<7x4x128xf32, #tpu.memory_space<vmem>>, %arg3: memref<7xi32, #tpu.memory_space<smem>>, %arg4: memref<32x32xf32, #tpu.memory_space<vmem>>, %arg5: memref<1x32xf32, #tpu.memory_space<vmem>>, %arg6: memref<1x32xf32, #tpu.memory_space<vmem>>, %arg7: memref<1x1xf32, #tpu.memory_space<vmem>>, %arg8: memref<32x32xf32, #tpu.memory_space<vmem>>, %arg9: memref<1x32xf32, #tpu.memory_space<vmem>>, %arg10: memref<32x32xf32, #tpu.memory_space<vmem>>, %arg11: memref<1x32xf32, #tpu.memory_space<vmem>>, %arg12: memref<32x32xf32, #tpu.memory_space<vmem>>, %arg13: memref<1x32xf32, #tpu.memory_space<vmem>>, %arg14: memref<32x128xf32, #tpu.memory_space<vmem>>, %arg15: memref<32x128xf32, #tpu.memory_space<vmem>>, %arg16: memref<32x128xf32, #tpu.memory_space<vmem>>, %arg17: memref<1x128xf32, #tpu.memory_space<vmem>>, %arg18: memref<7x4x128xf32, #tpu.memory_space<vmem>>, %arg19: memref<7x4x128xf32, #tpu.memory_space<vmem>>, %arg20: memref<4x32xf32, #tpu.memory_space<vmem>>, %arg21: memref<4x32xf32, #tpu.memory_space<vmem>>) attributes {dimension_semantics = [], scalar_prefetch = 0 : i64, scratch_operands = 2 : i64, tpu.core_type = #tpu.core_type<tc>} {
    %c0 = arith.constant 0 : index
    %c0_0 = arith.constant 0 : index
    %c0_1 = arith.constant 0 : index
    %0 = vector.load %arg0[%c0, %c0_0, %c0_1] : memref<4x128x32xf32, #tpu.memory_space<vmem>>, vector<4x128x32xf32>
    %cst = arith.constant dense<0.000000e+00> : vector<4x32xf32>
    %1 = vector.multi_reduction <add>, %0, %cst [1] : vector<4x128x32xf32> to vector<4x32xf32>
    %cst_2 = arith.constant 6.250000e-02 : f32
    %2 = vector.broadcast %cst_2 : f32 to vector<4x32xf32>
    %3 = arith.mulf %1, %2 : vector<4x32xf32>
    %c0_3 = arith.constant 0 : index
    %c0_4 = arith.constant 0 : index
    %4 = vector.load %arg8[%c0_3, %c0_4] : memref<32x32xf32, #tpu.memory_space<vmem>>, vector<32x32xf32>
    %cst_5 = arith.constant dense<0.000000e+00> : vector<4x32xf32>
    %5 = tpu.matmul %3, %4, %cst_5 {dimension_numbers = #tpu.dot_dimension_numbers<[1], [0], [0], [1], [0, 0, 1, 1], [], []>} : vector<4x32xf32>, vector<32x32xf32>, vector<4x32xf32> -> vector<4x32xf32>
    %c0_6 = arith.constant 0 : index
    %c0_7 = arith.constant 0 : index
    %6 = vector.load %arg9[%c0_6, %c0_7] : memref<1x32xf32, #tpu.memory_space<vmem>>, vector<1x32xf32>
    %7 = vector.broadcast %6 : vector<1x32xf32> to vector<4x32xf32>
    %8 = arith.addf %5, %7 : vector<4x32xf32>
    %c0_8 = arith.constant 0 : index
    %c0_9 = arith.constant 0 : index
    %9 = vector.load %arg20[%c0_8, %c0_9] : memref<4x32xf32, #tpu.memory_space<vmem>>, vector<4x32xf32>
    tpu.vector_store %arg20[%c0_8, %c0_9], %8 {strides = array<i32>} : memref<4x32xf32, #tpu.memory_space<vmem>>, vector<4x32xf32>,
    %c0_10 = arith.constant 0 : index
    %c0_11 = arith.constant 0 : index
    %10 = vector.load %arg10[%c0_10, %c0_11] : memref<32x32xf32, #tpu.memory_space<vmem>>, vector<32x32xf32>
    %cst_12 = arith.constant dense<0.000000e+00> : vector<4x32xf32>
    %11 = tpu.matmul %3, %10, %cst_12 {dimension_numbers = #tpu.dot_dimension_numbers<[1], [0], [0], [1], [0, 0, 1, 1], [], []>} : vector<4x32xf32>, vector<32x32xf32>, vector<4x32xf32> -> vector<4x32xf32>
    %c0_13 = arith.constant 0 : index
    %c0_14 = arith.constant 0 : index
    %12 = vector.load %arg11[%c0_13, %c0_14] : memref<1x32xf32, #tpu.memory_space<vmem>>, vector<1x32xf32>
    %13 = vector.broadcast %12 : vector<1x32xf32> to vector<4x32xf32>
    %14 = arith.addf %11, %13 : vector<4x32xf32>
    %c0_15 = arith.constant 0 : index
    %c0_16 = arith.constant 0 : index
    %15 = vector.load %arg21[%c0_15, %c0_16] : memref<4x32xf32, #tpu.memory_space<vmem>>, vector<4x32xf32>
    tpu.vector_store %arg21[%c0_15, %c0_16], %14 {strides = array<i32>} : memref<4x32xf32, #tpu.memory_space<vmem>>, vector<4x32xf32>,
    %16 = tpu.iota {dimensions = array<i32: 0>} : vector<4x1xi32>
    %17 = tpu.iota {dimensions = array<i32: 1>} : vector<1x128xi32>
    %c16_i32 = arith.constant 16 : i32
    %18 = vector.broadcast %c16_i32 : i32 to vector<1x128xi32>
    %19 = arith.cmpi slt, %17, %18 : vector<1x128xi32>
    %c0_i32 = arith.constant 0 : i32
    %c7_i32 = arith.constant 7 : i32
    %20 = arith.addi %c0_i32, %c7_i32 : i32
    %c1_i32 = arith.constant 1 : i32
    scf.for %arg22 = %c0_i32 to %20 step %c1_i32  : i32 {
      %c1_i32_18 = arith.constant 1 : i32
      %21 = arith.muli %arg22, %c1_i32_18 : i32
      %c0_i32_19 = arith.constant 0 : i32
      %22 = arith.addi %c0_i32_19, %21 : i32
      %c0_20 = arith.constant 0 : index
      %c0_21 = arith.constant 0 : index
      %23 = vector.load %arg20[%c0_20, %c0_21] : memref<4x32xf32, #tpu.memory_space<vmem>>, vector<4x32xf32>
      %c0_22 = arith.constant 0 : index
      %c0_23 = arith.constant 0 : index
      %24 = vector.load %arg21[%c0_22, %c0_23] : memref<4x32xf32, #tpu.memory_space<vmem>>, vector<4x32xf32>
      %c0_24 = arith.constant 0 : index
      %c0_25 = arith.constant 0 : index
      %25 = vector.load %arg4[%c0_24, %c0_25] : memref<32x32xf32, #tpu.memory_space<vmem>>, vector<32x32xf32>
      %cst_26 = arith.constant dense<0.000000e+00> : vector<4x32xf32>
      %26 = tpu.matmul %23, %25, %cst_26 {dimension_numbers = #tpu.dot_dimension_numbers<[1], [0], [0], [1], [0, 0, 1, 1], [], []>} : vector<4x32xf32>, vector<32x32xf32>, vector<4x32xf32> -> vector<4x32xf32>
      %c0_27 = arith.constant 0 : index
      %c0_28 = arith.constant 0 : index
      %27 = vector.load %arg5[%c0_27, %c0_28] : memref<1x32xf32, #tpu.memory_space<vmem>>, vector<1x32xf32>
      %28 = vector.broadcast %27 : vector<1x32xf32> to vector<4x32xf32>
      %29 = arith.addf %26, %28 : vector<4x32xf32>
      %c0_29 = arith.constant 0 : index
      %c0_30 = arith.constant 0 : index
      %c0_31 = arith.constant 0 : index
      %30 = vector.load %arg1[%c0_29, %c0_30, %c0_31] : memref<4x128x32xf32, #tpu.memory_space<vmem>>, vector<4x128x32xf32>
      %31 = vector.shape_cast %29 : vector<4x32xf32> to vector<4x1x32xf32>
      %32 = vector.broadcast %31 : vector<4x1x32xf32> to vector<4x128x32xf32>
      %33 = arith.addf %30, %32 : vector<4x128x32xf32>
      %cst_32 = arith.constant 0.000000e+00 : f32
      %34 = vector.broadcast %cst_32 : f32 to vector<4x128x32xf32>
      %35 = arith.maximumf %33, %34 : vector<4x128x32xf32>
      %c0_33 = arith.constant 0 : index
      %c0_34 = arith.constant 0 : index
      %36 = vector.load %arg6[%c0_33, %c0_34] : memref<1x32xf32, #tpu.memory_space<vmem>>, vector<1x32xf32>
      %37 = vector.shape_cast %36 : vector<1x32xf32> to vector<1x1x32xf32>
      %38 = vector.broadcast %37 : vector<1x1x32xf32> to vector<4x128x32xf32>
      %39 = arith.mulf %35, %38 : vector<4x128x32xf32>
      %cst_35 = arith.constant dense<0.000000e+00> : vector<4x128xf32>
      %40 = vector.multi_reduction <add>, %39, %cst_35 [2] : vector<4x128x32xf32> to vector<4x128xf32>
      %c0_36 = arith.constant 0 : index
      %c0_37 = arith.constant 0 : index
      %41 = vector.load %arg7[%c0_36, %c0_37] : memref<1x1xf32, #tpu.memory_space<vmem>>, vector<1x1xf32>
      %42 = vector.broadcast %41 : vector<1x1xf32> to vector<4x128xf32>
      %43 = arith.addf %40, %42 : vector<4x128xf32>
      %cst_38 = arith.constant -1.000000e+30 : f32
      %44 = vector.shape_cast %19 : vector<1x128xi1> to vector<1x128xi1>
      %45 = vector.broadcast %44 : vector<1x128xi1> to vector<4x128xi1>
      %46 = vector.broadcast %cst_38 : f32 to vector<4x128xf32>
      %47 = arith.select %45, %43, %46 : vector<4x128xi1>, vector<4x128xf32>
      %cst_39 = arith.constant dense<0xFF800000> : vector<4xf32>
      %48 = vector.multi_reduction <maximumf>, %47, %cst_39 [1] : vector<4x128xf32> to vector<4xf32>
      %49 = vector.shape_cast %48 : vector<4xf32> to vector<4x1xf32>
      %50 = vector.broadcast %49 : vector<4x1xf32> to vector<4x128xf32>
      %51 = arith.subf %47, %50 : vector<4x128xf32>
      %52 = math.exp %51 : vector<4x128xf32>
      %cst_40 = arith.constant dense<0.000000e+00> : vector<4xf32>
      %53 = vector.multi_reduction <add>, %52, %cst_40 [1] : vector<4x128xf32> to vector<4xf32>
      %54 = vector.shape_cast %53 : vector<4xf32> to vector<4x1xf32>
      %55 = vector.broadcast %54 : vector<4x1xf32> to vector<4x128xf32>
      %56 = arith.divf %52, %55 : vector<4x128xf32>
      %c0_41 = arith.constant 0 : index
      %c0_42 = arith.constant 0 : index
      %c0_43 = arith.constant 0 : index
      %57 = vector.load %arg0[%c0_41, %c0_42, %c0_43] : memref<4x128x32xf32, #tpu.memory_space<vmem>>, vector<4x128x32xf32>
      %58 = vector.shape_cast %56 : vector<4x128xf32> to vector<4x128x1xf32>
      %59 = vector.broadcast %58 : vector<4x128x1xf32> to vector<4x128x32xf32>
      %60 = arith.mulf %57, %59 : vector<4x128x32xf32>
      %cst_44 = arith.constant dense<0.000000e+00> : vector<4x32xf32>
      %61 = vector.multi_reduction <add>, %60, %cst_44 [1] : vector<4x128x32xf32> to vector<4x32xf32>
      %c0_45 = arith.constant 0 : index
      %c0_46 = arith.constant 0 : index
      %62 = vector.load %arg12[%c0_45, %c0_46] : memref<32x32xf32, #tpu.memory_space<vmem>>, vector<32x32xf32>
      %cst_47 = arith.constant dense<0.000000e+00> : vector<4x32xf32>
      %63 = tpu.matmul %23, %62, %cst_47 {dimension_numbers = #tpu.dot_dimension_numbers<[1], [0], [0], [1], [0, 0, 1, 1], [], []>} : vector<4x32xf32>, vector<32x32xf32>, vector<4x32xf32> -> vector<4x32xf32>
      %c0_48 = arith.constant 0 : index
      %c0_49 = arith.constant 0 : index
      %64 = vector.load %arg13[%c0_48, %c0_49] : memref<1x32xf32, #tpu.memory_space<vmem>>, vector<1x32xf32>
      %65 = vector.broadcast %64 : vector<1x32xf32> to vector<4x32xf32>
      %66 = arith.addf %63, %65 : vector<4x32xf32>
      %67 = arith.negf %66 : vector<4x32xf32>
      %68 = math.exp %67 : vector<4x32xf32>
      %cst_50 = arith.constant 1.000000e+00 : f32
      %69 = vector.broadcast %cst_50 : f32 to vector<4x32xf32>
      %70 = arith.addf %69, %68 : vector<4x32xf32>
      %71 = arith.divf %69, %70 : vector<4x32xf32>
      %72 = arith.mulf %71, %61 : vector<4x32xf32>
      %73 = arith.index_cast %22 : i32 to index
      %c0_51 = arith.constant 0 : index
      %c0_52 = arith.constant 0 : index
      %74 = vector.load %arg2[%73, %c0_51, %c0_52] : memref<7x4x128xf32, #tpu.memory_space<vmem>>, vector<1x4x128xf32>
      %75 = vector.shape_cast %74 : vector<1x4x128xf32> to vector<4x128xf32>
      %c0_53 = arith.constant 0 : index
      %c0_54 = arith.constant 0 : index
      %76 = vector.load %arg14[%c0_53, %c0_54] : memref<32x128xf32, #tpu.memory_space<vmem>>, vector<32x128xf32>
      %cst_55 = arith.constant dense<0.000000e+00> : vector<4x128xf32>
      %77 = tpu.matmul %72, %76, %cst_55 {dimension_numbers = #tpu.dot_dimension_numbers<[1], [0], [0], [1], [0, 0, 1, 1], [], []>} : vector<4x32xf32>, vector<32x128xf32>, vector<4x128xf32> -> vector<4x128xf32>
      %78 = arith.addf %75, %77 : vector<4x128xf32>
      %c0_56 = arith.constant 0 : index
      %c0_57 = arith.constant 0 : index
      %79 = vector.load %arg15[%c0_56, %c0_57] : memref<32x128xf32, #tpu.memory_space<vmem>>, vector<32x128xf32>
      %cst_58 = arith.constant dense<0.000000e+00> : vector<4x128xf32>
      %80 = tpu.matmul %23, %79, %cst_58 {dimension_numbers = #tpu.dot_dimension_numbers<[1], [0], [0], [1], [0, 0, 1, 1], [], []>} : vector<4x32xf32>, vector<32x128xf32>, vector<4x128xf32> -> vector<4x128xf32>
      %81 = arith.addf %78, %80 : vector<4x128xf32>
      %82 = vector.extract_strided_slice %81 {offsets = [0, 0], sizes = [4, 32], strides = [1, 1]} : vector<4x128xf32> to vector<4x32xf32>
      %83 = arith.negf %82 : vector<4x32xf32>
      %84 = math.exp %83 : vector<4x32xf32>
      %cst_59 = arith.constant 1.000000e+00 : f32
      %85 = vector.broadcast %cst_59 : f32 to vector<4x32xf32>
      %86 = arith.addf %85, %84 : vector<4x32xf32>
      %87 = arith.divf %85, %86 : vector<4x32xf32>
      %88 = vector.extract_strided_slice %81 {offsets = [0, 32], sizes = [4, 32], strides = [1, 1]} : vector<4x128xf32> to vector<4x32xf32>
      %89 = arith.negf %88 : vector<4x32xf32>
      %90 = math.exp %89 : vector<4x32xf32>
      %cst_60 = arith.constant 1.000000e+00 : f32
      %91 = vector.broadcast %cst_60 : f32 to vector<4x32xf32>
      %92 = arith.addf %91, %90 : vector<4x32xf32>
      %93 = arith.divf %91, %92 : vector<4x32xf32>
      %94 = vector.extract_strided_slice %81 {offsets = [0, 64], sizes = [4, 32], strides = [1, 1]} : vector<4x128xf32> to vector<4x32xf32>
      %95 = math.tanh %94 : vector<4x32xf32>
      %96 = vector.extract_strided_slice %81 {offsets = [0, 96], sizes = [4, 32], strides = [1, 1]} : vector<4x128xf32> to vector<4x32xf32>
      %97 = arith.negf %96 : vector<4x32xf32>
      %98 = math.exp %97 : vector<4x32xf32>
      %cst_61 = arith.constant 1.000000e+00 : f32
      %99 = vector.broadcast %cst_61 : f32 to vector<4x32xf32>
      %100 = arith.addf %99, %98 : vector<4x32xf32>
      %101 = arith.divf %99, %100 : vector<4x32xf32>
      %102 = arith.mulf %93, %24 : vector<4x32xf32>
      %103 = arith.mulf %87, %95 : vector<4x32xf32>
      %104 = arith.addf %102, %103 : vector<4x32xf32>
      %105 = math.tanh %104 : vector<4x32xf32>
      %106 = arith.mulf %101, %105 : vector<4x32xf32>
      %c0_62 = arith.constant 0 : index
      %c0_63 = arith.constant 0 : index
      %107 = vector.load %arg16[%c0_62, %c0_63] : memref<32x128xf32, #tpu.memory_space<vmem>>, vector<32x128xf32>
      %cst_64 = arith.constant dense<0.000000e+00> : vector<4x128xf32>
      %108 = tpu.matmul %106, %107, %cst_64 {dimension_numbers = #tpu.dot_dimension_numbers<[1], [0], [0], [1], [0, 0, 1, 1], [], []>} : vector<4x32xf32>, vector<32x128xf32>, vector<4x128xf32> -> vector<4x128xf32>
      %c0_65 = arith.constant 0 : index
      %c0_66 = arith.constant 0 : index
      %109 = vector.load %arg17[%c0_65, %c0_66] : memref<1x128xf32, #tpu.memory_space<vmem>>, vector<1x128xf32>
      %110 = vector.broadcast %109 : vector<1x128xf32> to vector<4x128xf32>
      %111 = arith.addf %108, %110 : vector<4x128xf32>
      %112 = arith.index_cast %22 : i32 to index
      %113 = memref.load %arg3[%112] : memref<7xi32, #tpu.memory_space<smem>>
      %114 = vector.broadcast %113 : i32 to vector<4x1xi32>
      %115 = arith.cmpi slt, %16, %114 : vector<4x1xi32>
      %cst_67 = arith.constant 0.000000e+00 : f32
      %116 = vector.shape_cast %115 : vector<4x1xi1> to vector<4x1xi1>
      %117 = vector.broadcast %116 : vector<4x1xi1> to vector<4x128xi1>
      %118 = vector.broadcast %cst_67 : f32 to vector<4x128xf32>
      %119 = arith.select %117, %111, %118 : vector<4x128xi1>, vector<4x128xf32>
      %120 = arith.index_cast %22 : i32 to index
      %c0_68 = arith.constant 0 : index
      %c0_69 = arith.constant 0 : index
      %121 = vector.load %arg18[%120, %c0_68, %c0_69] : memref<7x4x128xf32, #tpu.memory_space<vmem>>, vector<1x4x128xf32>
      %122 = vector.shape_cast %121 : vector<1x4x128xf32> to vector<4x128xf32>
      %123 = vector.shape_cast %119 : vector<4x128xf32> to vector<1x4x128xf32>
      tpu.vector_store %arg18[%120, %c0_68, %c0_69], %123 {strides = array<i32>} : memref<7x4x128xf32, #tpu.memory_space<vmem>>, vector<1x4x128xf32>,
      %cst_70 = arith.constant 0.000000e+00 : f32
      %124 = vector.shape_cast %115 : vector<4x1xi1> to vector<4x1xi1>
      %125 = vector.broadcast %124 : vector<4x1xi1> to vector<4x128xi1>
      %126 = vector.broadcast %cst_70 : f32 to vector<4x128xf32>
      %127 = arith.select %125, %56, %126 : vector<4x128xi1>, vector<4x128xf32>
      %128 = arith.index_cast %22 : i32 to index
      %c0_71 = arith.constant 0 : index
      %c0_72 = arith.constant 0 : index
      %129 = vector.load %arg19[%128, %c0_71, %c0_72] : memref<7x4x128xf32, #tpu.memory_space<vmem>>, vector<1x4x128xf32>
      %130 = vector.shape_cast %129 : vector<1x4x128xf32> to vector<4x128xf32>
      %131 = vector.shape_cast %127 : vector<4x128xf32> to vector<1x4x128xf32>
      tpu.vector_store %arg19[%128, %c0_71, %c0_72], %131 {strides = array<i32>} : memref<7x4x128xf32, #tpu.memory_space<vmem>>, vector<1x4x128xf32>,
      %c0_73 = arith.constant 0 : index
      %c0_74 = arith.constant 0 : index
      %132 = vector.load %arg20[%c0_73, %c0_74] : memref<4x32xf32, #tpu.memory_space<vmem>>, vector<4x32xf32>
      tpu.vector_store %arg20[%c0_73, %c0_74], %106 {strides = array<i32>} : memref<4x32xf32, #tpu.memory_space<vmem>>, vector<4x32xf32>,
      %c0_75 = arith.constant 0 : index
      %c0_76 = arith.constant 0 : index
      %133 = vector.load %arg21[%c0_75, %c0_76] : memref<4x32xf32, #tpu.memory_space<vmem>>, vector<4x32xf32>
      tpu.vector_store %arg21[%c0_75, %c0_76], %104 {strides = array<i32>} : memref<4x32xf32, #tpu.memory_space<vmem>>, vector<4x32xf32>,
    }
    %c7_i32_17 = arith.constant 7 : i32
    return
  }
}

</mosaic_0001>

<llo_original>
// kernel: tpu_custom_call.1
$region0: #{tpu_custom_call.1}
  #allocation0 [shape = 'u32[]', space=smem, size = 0x4, offset = 0x4, fixed_abs, tag = 'smem constant byte address 0x4 - core index']
  #allocation1 [shape = 'u32[144,128]{1,0:T(1,128)}', space=vmem, size = 0x12000, scoped, tag = 'internal scratch']
  #allocation2 [shape = 'f32[4,32]{1,0:T(4,128)}', space=vmem, size = 0x800, scoped, tag = 'scratch operand']
  #allocation3 [shape = 'f32[4,32]{1,0:T(4,128)}', space=vmem, size = 0x800, scoped, tag = 'scratch operand']
  #allocation4 [shape = 'f32[1,1]{1,0:T(1,128)S(1)}', space=vmem, size = 0x200, scoped, tag = 'scoped memory for tpu_custom_call.1']
  %s0 = inlined_call_operand.vmem [shape: f32[4,128,32], index: 0, kind: input, shape index: {}]
  %s1 = inlined_call_operand.vmem [shape: f32[4,128,32], index: 1, kind: input, shape index: {}]
  %s2 = inlined_call_operand.vmem [shape: f32[7,4,128], index: 2, kind: input, shape index: {}]
  %s3 = inlined_call_operand.vmem [shape: s32[7], index: 3, kind: input, shape index: {}]
  %s4 = inlined_call_operand.vmem [shape: f32[32,32], index: 4, kind: input, shape index: {}]
  %s5 = inlined_call_operand.vmem [shape: f32[1,32], index: 5, kind: input, shape index: {}]
  %s6 = inlined_call_operand.vmem [shape: f32[1,32], index: 6, kind: input, shape index: {}]
  %s7 = inlined_call_operand.<no memory space> [shape: f32[1,1], index: 7, kind: input, shape index: {}]
  %s8 = inlined_call_operand.vmem [shape: f32[32,32], index: 8, kind: input, shape index: {}]
  %s9 = inlined_call_operand.vmem [shape: f32[1,32], index: 9, kind: input, shape index: {}]
  %s10 = inlined_call_operand.vmem [shape: f32[32,32], index: 10, kind: input, shape index: {}]
  %s11 = inlined_call_operand.vmem [shape: f32[1,32], index: 11, kind: input, shape index: {}]
  %s12 = inlined_call_operand.vmem [shape: f32[32,32], index: 12, kind: input, shape index: {}]
  %s13 = inlined_call_operand.vmem [shape: f32[1,32], index: 13, kind: input, shape index: {}]
  %s14 = inlined_call_operand.vmem [shape: f32[32,128], index: 14, kind: input, shape index: {}]
  %s15 = inlined_call_operand.vmem [shape: f32[32,128], index: 15, kind: input, shape index: {}]
  %s16 = inlined_call_operand.vmem [shape: f32[32,128], index: 16, kind: input, shape index: {}]
  %s17 = inlined_call_operand.vmem [shape: f32[1,128], index: 17, kind: input, shape index: {}]
  %s18 = inlined_call_operand.hbm [shape: f32[7,4,128], index: 18, kind: output, shape index: {0}]
  %s19 = inlined_call_operand.hbm [shape: f32[7,4,128], index: 19, kind: output, shape index: {1}]
  %20 = xla_tuple %s18, %s19
  %s21 = sld [smem:[#allocation0]]
  $region101: #{tpu_custom_call.1} parent=0
    _
  %s23 = ssub.s32 1, %s21
  %s24 = scalar_select 0, %s23, %s21
  %v25 = vstv %s7
  %26 = vst [vmem:[#allocation4] sm:$0x1] %v25
  $region1: #{tpu_custom_call.1} parent=0
    #allocation5 [shape = 'u8[512]{0}', space=smem, size = 0x200, scoped, tag = 'input window, operand 3, single buffered']
    #allocation6 [shape = 's32[1]{0}', space=sflag, size = 0x4, scoped, tag = 'scoped memory for tpu_custom_call.1']
    #allocation7 [shape = 's32[1]{0}', space=sflag, size = 0x4, scoped, tag = 'scoped memory for tpu_custom_call.1']
    #allocation8 [shape = 'u8[14336]{0}', space=vmem, size = 0x3800, scoped, tag = 'output window, operand 0, single buffered']
    #allocation9 [shape = 'u8[14336]{0}', space=vmem, size = 0x3800, scoped, tag = 'output window, operand 1, single buffered']
    #allocation10 [shape = 's32[1]{0}', space=sflag, size = 0x4, scoped, tag = 'scoped memory for tpu_custom_call.1']
    %27 = vsyncpa [#allocation7], 0
    %28 = vsyncpa [#allocation6], 0
    %29 = vsyncpa [#allocation10], 0
    // Predicated region
    $region2: #{tpu_custom_call.1} parent=1 // pred_check
      _
    $region3: #{tpu_custom_call.1} parent=1 // pred_check_branch
      %31 = sbr.rel (0) target = $region5
    $region4: #{tpu_custom_call.1} parent=1 // pred_region
      _
    $region5: #{tpu_custom_call.1} parent=1 // pred_fallthru
      _
    // Predicated region
    $region6: #{tpu_custom_call.1} parent=1 // pred_check
      _
    $region7: #{tpu_custom_call.1} parent=1 // pred_check_branch
      %33 = sbr.rel (0) target = $region9
    $region8: #{tpu_custom_call.1} parent=1 // pred_region
      _
    $region9: #{tpu_custom_call.1} parent=1 // pred_fallthru
      _
    // Predicated region
    $region10: #{tpu_custom_call.1} parent=1 // pred_check
      _
    $region11: #{tpu_custom_call.1} parent=1 // pred_check_branch
      %35 = sbr.rel (0) target = $region13
    $region12: #{tpu_custom_call.1} parent=1 // pred_region
      _
    $region13: #{tpu_custom_call.1} parent=1 // pred_fallthru
      _
    // Predicated region
    $region14: #{tpu_custom_call.1} parent=1 // pred_check
      _
    $region15: #{tpu_custom_call.1} parent=1 // pred_check_branch
      %37 = sbr.rel (0) target = $region17
    $region16: #{tpu_custom_call.1} parent=1 // pred_region
      %s39 = ssub.s32 16, 16
      %40 = vsyncadd [#allocation7], %s39
      %s42 = sshll.u32 %s3, 4
      %s43 = int_to_ptr.vmem [resolvable:$true] %s42
      %45 = dma.vmem_to_smem %s43, 16, [#allocation5], [#allocation7]
    $region17: #{tpu_custom_call.1} parent=1 // pred_fallthru
      _
    // Predicated region
    $region18: #{tpu_custom_call.1} parent=1 // pred_check
      _
    $region19: #{tpu_custom_call.1} parent=1 // pred_check_branch
      %47 = sbr.rel (0) target = $region21
    $region20: #{tpu_custom_call.1} parent=1 // pred_region
      _
    $region21: #{tpu_custom_call.1} parent=1 // pred_fallthru
      _
    // Predicated region
    $region22: #{tpu_custom_call.1} parent=1 // pred_check
      _
    $region23: #{tpu_custom_call.1} parent=1 // pred_check_branch
      %49 = sbr.rel (0) target = $region25
    $region24: #{tpu_custom_call.1} parent=1 // pred_region
      _
    $region25: #{tpu_custom_call.1} parent=1 // pred_fallthru
      _
    // Predicated region
    $region26: #{tpu_custom_call.1} parent=1 // pred_check
      _
    $region27: #{tpu_custom_call.1} parent=1 // pred_check_branch
      %51 = sbr.rel (0) target = $region29
    $region28: #{tpu_custom_call.1} parent=1 // pred_region
      _
    $region29: #{tpu_custom_call.1} parent=1 // pred_fallthru
      _
    // Predicated region
    $region30: #{tpu_custom_call.1} parent=1 // pred_check
      _
    $region31: #{tpu_custom_call.1} parent=1 // pred_check_branch
      %53 = sbr.rel (0) target = $region33
    $region32: #{tpu_custom_call.1} parent=1 // pred_region
      _
    $region33: #{tpu_custom_call.1} parent=1 // pred_fallthru
      _
    // Predicated region
    $region34: #{tpu_custom_call.1} parent=1 // pred_check
      _
    $region35: #{tpu_custom_call.1} parent=1 // pred_check_branch
      %55 = sbr.rel (0) target = $region37
    $region36: #{tpu_custom_call.1} parent=1 // pred_region
      _
    $region37: #{tpu_custom_call.1} parent=1 // pred_fallthru
      _
    // Predicated region
    $region38: #{tpu_custom_call.1} parent=1 // pred_check
      _
    $region39: #{tpu_custom_call.1} parent=1 // pred_check_branch
      %57 = sbr.rel (0) target = $region41
    $region40: #{tpu_custom_call.1} parent=1 // pred_region
      _
    $region41: #{tpu_custom_call.1} parent=1 // pred_fallthru
      _
    // Predicated region
    $region42: #{tpu_custom_call.1} parent=1 // pred_check
      _
    $region43: #{tpu_custom_call.1} parent=1 // pred_check_branch
      %59 = sbr.rel (0) target = $region45
    $region44: #{tpu_custom_call.1} parent=1 // pred_region
      _
    $region45: #{tpu_custom_call.1} parent=1 // pred_fallthru
      _
    // Predicated region
    $region46: #{tpu_custom_call.1} parent=1 // pred_check
      _
    $region47: #{tpu_custom_call.1} parent=1 // pred_check_branch
      %61 = sbr.rel (0) target = $region49
    $region48: #{tpu_custom_call.1} parent=1 // pred_region
      _
    $region49: #{tpu_custom_call.1} parent=1 // pred_fallthru
      _
    // Predicated region
    $region50: #{tpu_custom_call.1} parent=1 // pred_check
      _
    $region51: #{tpu_custom_call.1} parent=1 // pred_check_branch
      %63 = sbr.rel (0) target = $region53
    $region52: #{tpu_custom_call.1} parent=1 // pred_region
      _
    $region53: #{tpu_custom_call.1} parent=1 // pred_fallthru
      _
    // Predicated region
    $region54: #{tpu_custom_call.1} parent=1 // pred_check
      _
    $region55: #{tpu_custom_call.1} parent=1 // pred_check_branch
      %65 = sbr.rel (0) target = $region57
    $region56: #{tpu_custom_call.1} parent=1 // pred_region
      _
    $region57: #{tpu_custom_call.1} parent=1 // pred_fallthru
      _
    // Predicated region
    $region58: #{tpu_custom_call.1} parent=1 // pred_check
      _
    $region59: #{tpu_custom_call.1} parent=1 // pred_check_branch
      %67 = sbr.rel (0) target = $region61
    $region60: #{tpu_custom_call.1} parent=1 // pred_region
      _
    $region61: #{tpu_custom_call.1} parent=1 // pred_fallthru
      _
    // Predicated region
    $region62: #{tpu_custom_call.1} parent=1 // pred_check
      _
    $region63: #{tpu_custom_call.1} parent=1 // pred_check_branch
      %69 = sbr.rel (0) target = $region65
    $region64: #{tpu_custom_call.1} parent=1 // pred_region
      _
    $region65: #{tpu_custom_call.1} parent=1 // pred_fallthru
      _
    // Predicated region
    $region66: #{tpu_custom_call.1} parent=1 // pred_check
      _
    $region67: #{tpu_custom_call.1} parent=1 // pred_check_branch
      %71 = sbr.rel (0) target = $region69
    $region68: #{tpu_custom_call.1} parent=1 // pred_region
      _
    $region69: #{tpu_custom_call.1} parent=1 // pred_fallthru
      _
    // Predicated region
    $region70: #{tpu_custom_call.1} parent=1 // pred_check
      _
    $region71: #{tpu_custom_call.1} parent=1 // pred_check_branch
      %73 = sbr.rel (0) target = $region73
    $region72: #{tpu_custom_call.1} parent=1 // pred_region
      _
    $region73: #{tpu_custom_call.1} parent=1 // pred_fallthru
      _
    // Predicated region
    $region74: #{tpu_custom_call.1} parent=1 // pred_check
      _
    $region75: #{tpu_custom_call.1} parent=1 // pred_check_branch
      %75 = sbr.rel (0) target = $region77
    $region76: #{tpu_custom_call.1} parent=1 // pred_region
      %76 = dma.done [#allocation7], 16
    $region77: #{tpu_custom_call.1} parent=1 // pred_fallthru
      _
    %77 = sfence
    %v78 = vld [vmem:[%s0] sm:$0xff]
    %v79 = vld [vmem:[%s0 + $0x8] sm:$0xff]
    %v80 = vld [vmem:[%s0 + $0x10] sm:$0xff]
    %v81 = vld [vmem:[%s0 + $0x18] sm:$0xff]
    %v82 = vld [vmem:[%s0 + $0x20] sm:$0xff]
    %v83 = vld [vmem:[%s0 + $0x28] sm:$0xff]
    %v84 = vld [vmem:[%s0 + $0x30] sm:$0xff]
    %v85 = vld [vmem:[%s0 + $0x38] sm:$0xff]
    %v86 = vld [vmem:[%s0 + $0x40] sm:$0xff]
    %v87 = vld [vmem:[%s0 + $0x48] sm:$0xff]
    %v88 = vld [vmem:[%s0 + $0x50] sm:$0xff]
    %v89 = vld [vmem:[%s0 + $0x58] sm:$0xff]
    %v90 = vld [vmem:[%s0 + $0x60] sm:$0xff]
    %v91 = vld [vmem:[%s0 + $0x68] sm:$0xff]
    %v92 = vld [vmem:[%s0 + $0x70] sm:$0xff]
    %v93 = vld [vmem:[%s0 + $0x78] sm:$0xff]
    %v94 = vld [vmem:[%s0 + $0x80] sm:$0xff]
    %v95 = vld [vmem:[%s0 + $0x88] sm:$0xff]
    %v96 = vld [vmem:[%s0 + $0x90] sm:$0xff]
    %v97 = vld [vmem:[%s0 + $0x98] sm:$0xff]
    %v98 = vld [vmem:[%s0 + $0xa0] sm:$0xff]
    %v99 = vld [vmem:[%s0 + $0xa8] sm:$0xff]
    %v100 = vld [vmem:[%s0 + $0xb0] sm:$0xff]
    %v101 = vld [vmem:[%s0 + $0xb8] sm:$0xff]
    %v102 = vld [vmem:[%s0 + $0xc0] sm:$0xff]
    %v103 = vld [vmem:[%s0 + $0xc8] sm:$0xff]
    %v104 = vld [vmem:[%s0 + $0xd0] sm:$0xff]
    %v105 = vld [vmem:[%s0 + $0xd8] sm:$0xff]
    %v106 = vld [vmem:[%s0 + $0xe0] sm:$0xff]
    %v107 = vld [vmem:[%s0 + $0xe8] sm:$0xff]
    %v108 = vld [vmem:[%s0 + $0xf0] sm:$0xff]
    %v109 = vld [vmem:[%s0 + $0xf8] sm:$0xff]
    %v110 = vld [vmem:[%s0 + $0x100] sm:$0xff]
    %v111 = vld [vmem:[%s0 + $0x108] sm:$0xff]
    %v112 = vld [vmem:[%s0 + $0x110] sm:$0xff]
    %v113 = vld [vmem:[%s0 + $0x118] sm:$0xff]
    %v114 = vld [vmem:[%s0 + $0x120] sm:$0xff]
    %v115 = vld [vmem:[%s0 + $0x128] sm:$0xff]
    %v116 = vld [vmem:[%s0 + $0x130] sm:$0xff]
    %v117 = vld [vmem:[%s0 + $0x138] sm:$0xff]
    %v118 = vld [vmem:[%s0 + $0x140] sm:$0xff]
    %v119 = vld [vmem:[%s0 + $0x148] sm:$0xff]
    %v120 = vld [vmem:[%s0 + $0x150] sm:$0xff]
    %v121 = vld [vmem:[%s0 + $0x158] sm:$0xff]
    %v122 = vld [vmem:[%s0 + $0x160] sm:$0xff]
    %v123 = vld [vmem:[%s0 + $0x168] sm:$0xff]
    %v124 = vld [vmem:[%s0 + $0x170] sm:$0xff]
    %v125 = vld [vmem:[%s0 + $0x178] sm:$0xff]
    %v126 = vld [vmem:[%s0 + $0x180] sm:$0xff]
    %v127 = vld [vmem:[%s0 + $0x188] sm:$0xff]
    %v128 = vld [vmem:[%s0 + $0x190] sm:$0xff]
    %v129 = vld [vmem:[%s0 + $0x198] sm:$0xff]
    %v130 = vld [vmem:[%s0 + $0x1a0] sm:$0xff]
    %v131 = vld [vmem:[%s0 + $0x1a8] sm:$0xff]
    %v132 = vld [vmem:[%s0 + $0x1b0] sm:$0xff]
    %v133 = vld [vmem:[%s0 + $0x1b8] sm:$0xff]
    %v134 = vld [vmem:[%s0 + $0x1c0] sm:$0xff]
    %v135 = vld [vmem:[%s0 + $0x1c8] sm:$0xff]
    %v136 = vld [vmem:[%s0 + $0x1d0] sm:$0xff]
    %v137 = vld [vmem:[%s0 + $0x1d8] sm:$0xff]
    %v138 = vld [vmem:[%s0 + $0x1e0] sm:$0xff]
    %v139 = vld [vmem:[%s0 + $0x1e8] sm:$0xff]
    %v140 = vld [vmem:[%s0 + $0x1f0] sm:$0xff]
    %v141 = vld [vmem:[%s0 + $0x1f8] sm:$0xff]
    %vm142 = vcmask 261120
    %v143 = vsel %vm142, %v78, 0.0
    %v144 = vsel %vm142, %v79, 0.0
    %v145 = vadd.f32 %v143, %v144
    %v146 = vsel %vm142, %v80, 0.0
    %v147 = vadd.f32 %v145, %v146
    %v148 = vsel %vm142, %v81, 0.0
    %v149 = vadd.f32 %v147, %v148
    %v150 = vsel %vm142, %v82, 0.0
    %v151 = vadd.f32 %v149, %v150
    %v152 = vsel %vm142, %v83, 0.0
    %v153 = vadd.f32 %v151, %v152
    %v154 = vsel %vm142, %v84, 0.0
    %v155 = vadd.f32 %v153, %v154
    %v156 = vsel %vm142, %v85, 0.0
    %v157 = vadd.f32 %v155, %v156
    %v158 = vsel %vm142, %v86, 0.0
    %v159 = vadd.f32 %v157, %v158
    %v160 = vsel %vm142, %v87, 0.0
    %v161 = vadd.f32 %v159, %v160
    %v162 = vsel %vm142, %v88, 0.0
    %v163 = vadd.f32 %v161, %v162
    %v164 = vsel %vm142, %v89, 0.0
    %v165 = vadd.f32 %v163, %v164
    %v166 = vsel %vm142, %v90, 0.0
    %v167 = vadd.f32 %v165, %v166
    %v168 = vsel %vm142, %v91, 0.0
    %v169 = vadd.f32 %v167, %v168
    %v170 = vsel %vm142, %v92, 0.0
    %v171 = vadd.f32 %v169, %v170
    %v172 = vsel %vm142, %v93, 0.0
    %v173 = vadd.f32 %v171, %v172
    %v174 = vrot.slane %v173, 4
    %v175 = vadd.f32 %v173, %v174
    %v176 = vrot.slane %v175, 2
    %v177 = vadd.f32 %v175, %v176
    %v178 = vrot.slane %v177, 1
    %v179 = vadd.f32 %v177, %v178
    %v180 = vsel %vm142, %v94, 0.0
    %v181 = vsel %vm142, %v95, 0.0
    %v182 = vadd.f32 %v180, %v181
    %v183 = vsel %vm142, %v96, 0.0
    %v184 = vadd.f32 %v182, %v183
    %v185 = vsel %vm142, %v97, 0.0
    %v186 = vadd.f32 %v184, %v185
    %v187 = vsel %vm142, %v98, 0.0
    %v188 = vadd.f32 %v186, %v187
    %v189 = vsel %vm142, %v99, 0.0
    %v190 = vadd.f32 %v188, %v189
    %v191 = vsel %vm142, %v100, 0.0
    %v192 = vadd.f32 %v190, %v191
    %v193 = vsel %vm142, %v101, 0.0
    %v194 = vadd.f32 %v192, %v193
    %v195 = vsel %vm142, %v102, 0.0
    %v196 = vadd.f32 %v194, %v195
    %v197 = vsel %vm142, %v103, 0.0
    %v198 = vadd.f32 %v196, %v197
    %v199 = vsel %vm142, %v104, 0.0
    %v200 = vadd.f32 %v198, %v199
    %v201 = vsel %vm142, %v105, 0.0
    %v202 = vadd.f32 %v200, %v201
    %v203 = vsel %vm142, %v106, 0.0
    %v204 = vadd.f32 %v202, %v203
    %v205 = vsel %vm142, %v107, 0.0
    %v206 = vadd.f32 %v204, %v205
    %v207 = vsel %vm142, %v108, 0.0
    %v208 = vadd.f32 %v206, %v207
    %v209 = vsel %vm142, %v109, 0.0
    %v210 = vadd.f32 %v208, %v209
    %v211 = vrot.slane %v210, 4
    %v212 = vadd.f32 %v210, %v211
    %v213 = vrot.slane %v212, 2
    %v214 = vadd.f32 %v212, %v213
    %v215 = vrot.slane %v214, 1
    %v216 = vadd.f32 %v214, %v215
    %v217 = vsel %vm142, %v110, 0.0
    %v218 = vsel %vm142, %v111, 0.0
    %v219 = vadd.f32 %v217, %v218
    %v220 = vsel %vm142, %v112, 0.0
    %v221 = vadd.f32 %v219, %v220
    %v222 = vsel %vm142, %v113, 0.0
    %v223 = vadd.f32 %v221, %v222
    %v224 = vsel %vm142, %v114, 0.0
    %v225 = vadd.f32 %v223, %v224
    %v226 = vsel %vm142, %v115, 0.0
    %v227 = vadd.f32 %v225, %v226
    %v228 = vsel %vm142, %v116, 0.0
    %v229 = vadd.f32 %v227, %v228
    %v230 = vsel %vm142, %v117, 0.0
    %v231 = vadd.f32 %v229, %v230
    %v232 = vsel %vm142, %v118, 0.0
    %v233 = vadd.f32 %v231, %v232
    %v234 = vsel %vm142, %v119, 0.0
    %v235 = vadd.f32 %v233, %v234
    %v236 = vsel %vm142, %v120, 0.0
    %v237 = vadd.f32 %v235, %v236
    %v238 = vsel %vm142, %v121, 0.0
    %v239 = vadd.f32 %v237, %v238
    %v240 = vsel %vm142, %v122, 0.0
    %v241 = vadd.f32 %v239, %v240
    %v242 = vsel %vm142, %v123, 0.0
    %v243 = vadd.f32 %v241, %v242
    %v244 = vsel %vm142, %v124, 0.0
    %v245 = vadd.f32 %v243, %v244
    %v246 = vsel %vm142, %v125, 0.0
    %v247 = vadd.f32 %v245, %v246
    %v248 = vrot.slane %v247, 4
    %v249 = vadd.f32 %v247, %v248
    %v250 = vrot.slane %v249, 2
    %v251 = vadd.f32 %v249, %v250
    %v252 = vrot.slane %v251, 1
    %v253 = vadd.f32 %v251, %v252
    %v254 = vsel %vm142, %v126, 0.0
    %v255 = vsel %vm142, %v127, 0.0
    %v256 = vadd.f32 %v254, %v255
    %v257 = vsel %vm142, %v128, 0.0
    %v258 = vadd.f32 %v256, %v257
    %v259 = vsel %vm142, %v129, 0.0
    %v260 = vadd.f32 %v258, %v259
    %v261 = vsel %vm142, %v130, 0.0
    %v262 = vadd.f32 %v260, %v261
    %v263 = vsel %vm142, %v131, 0.0
    %v264 = vadd.f32 %v262, %v263
    %v265 = vsel %vm142, %v132, 0.0
    %v266 = vadd.f32 %v264, %v265
    %v267 = vsel %vm142, %v133, 0.0
    %v268 = vadd.f32 %v266, %v267
    %v269 = vsel %vm142, %v134, 0.0
    %v270 = vadd.f32 %v268, %v269
    %v271 = vsel %vm142, %v135, 0.0
    %v272 = vadd.f32 %v270, %v271
    %v273 = vsel %vm142, %v136, 0.0
    %v274 = vadd.f32 %v272, %v273
    %v275 = vsel %vm142, %v137, 0.0
    %v276 = vadd.f32 %v274, %v275
    %v277 = vsel %vm142, %v138, 0.0
    %v278 = vadd.f32 %v276, %v277
    %v279 = vsel %vm142, %v139, 0.0
    %v280 = vadd.f32 %v278, %v279
    %v281 = vsel %vm142, %v140, 0.0
    %v282 = vadd.f32 %v280, %v281
    %v283 = vsel %vm142, %v141, 0.0
    %v284 = vadd.f32 %v282, %v283
    %v285 = vrot.slane %v284, 4
    %v286 = vadd.f32 %v284, %v285
    %v287 = vrot.slane %v286, 2
    %v288 = vadd.f32 %v286, %v287
    %v289 = vrot.slane %v288, 1
    %v290 = vadd.f32 %v288, %v289
    %v291 = vmul.f32 %v179, 0.0625
    %v292 = vmul.f32 %v216, 0.0625
    %v293 = vmul.f32 %v253, 0.0625
    %v294 = vmul.f32 %v290, 0.0625
    %v295 = vld [vmem:[%s8] sm:$0xff]
    %v296 = vld [vmem:[%s8 + $0x8] sm:$0xff]
    %v297 = vld [vmem:[%s8 + $0x10] sm:$0xff]
    %v298 = vld [vmem:[%s8 + $0x18] sm:$0xff]
    %v299 = vld [vmem:[%s9] sm:$0x1]
    %v301 = vlaneseq
    %v302 = vshrl.u32 %v301, 7
    %v303 = vsub.s32 0, %v302
    %v304 = vrot.slane %v299, %v303
    %vm310 = vcmask 1041409
    %v311 = vsel %vm310, %v292, %v291
    %vm312 = vcmask 1042434
    %v313 = vsel %vm312, %v293, %v311
    %vm314 = vcmask 1043459
    %v315 = vsel %vm314, %v294, %v313
    %v316 = vsel %vm142, %v315, 0
    %318 = vmatprep.subr.mxu0 0.0
    %319 = vmatpush1.msra.mxu0 0.0
    %320 = vmatprep.subr.mxu0 0.0
    %321 = vmatpush1.msra.mxu0 0.0
    %322 = vmatprep.subr.mxu0 0.0
    %323 = vmatpush1.msra.mxu0 0.0
    %324 = vmatprep.subr.mxu0 0.0
    %325 = vmatpush1.msra.mxu0 0.0
    %326 = vmatprep.subr.mxu0 0.0
    %327 = vmatpush1.msra.mxu0 0.0
    %328 = vmatprep.subr.mxu0 0.0
    %329 = vmatpush1.msra.mxu0 0.0
    %330 = vmatprep.subr.mxu0 0.0
    %331 = vmatpush1.msra.mxu0 0.0
    %332 = vmatprep.subr.mxu0 0.0
    %333 = vmatpush1.msra.mxu0 0.0
    %334 = vmatprep.subr.mxu0 0.0
    %335 = vmatpush1.msra.mxu0 0.0
    %336 = vmatprep.subr.mxu0 0.0
    %337 = vmatpush1.msra.mxu0 0.0
    %338 = vmatprep.subr.mxu0 0.0
    %339 = vmatpush1.msra.mxu0 0.0
    %340 = vmatprep.subr.mxu0 0.0
    %341 = vmatpush1.msra.mxu0 0.0
    %342 = vmatprep.subr.mxu0 0.0
    %343 = vmatpush1.msra.mxu0 %v298
    %344 = vmatprep.subr.mxu0 0.0
    %345 = vmatpush1.msra.mxu0 %v297
    %346 = vmatprep.subr.mxu0 0.0
    %347 = vmatpush1.msra.mxu0 %v296
    %348 = vmatprep.subr.mxu0 0.0
    %349 = vmatpush1.msra.mxu0 %v295
    %350 = vmatprep.subr.mxu0 0.0
    %351 = vmatpush2.msra.mxu0 0.0
    %352 = vmatprep.subr.mxu0 0.0
    %353 = vmatpush2.msra.mxu0 0.0
    %354 = vmatprep.subr.mxu0 0.0
    %355 = vmatpush2.msra.mxu0 0.0
    %356 = vmatprep.subr.mxu0 0.0
    %357 = vmatpush2.msra.mxu0 0.0
    %358 = vmatprep.subr.mxu0 0.0
    %359 = vmatpush2.msra.mxu0 0.0
    %360 = vmatprep.subr.mxu0 0.0
    %361 = vmatpush2.msra.mxu0 0.0
    %362 = vmatprep.subr.mxu0 0.0
    %363 = vmatpush2.msra.mxu0 0.0
    %364 = vmatprep.subr.mxu0 0.0
    %365 = vmatpush2.msra.mxu0 0.0
    %366 = vmatprep.subr.mxu0 0.0
    %367 = vmatpush2.msra.mxu0 0.0
    %368 = vmatprep.subr.mxu0 0.0
    %369 = vmatpush2.msra.mxu0 0.0
    %370 = vmatprep.subr.mxu0 0.0
    %371 = vmatpush2.msra.mxu0 0.0
    %372 = vmatprep.subr.mxu0 0.0
    %373 = vmatpush2.msra.mxu0 0.0
    %374 = vmatprep.subr.mxu0 0.0
    %375 = vmatpush2.msra.mxu0 0.0
    %376 = vmatprep.subr.mxu0 0.0
    %377 = vmatpush2.msra.mxu0 0.0
    %378 = vmatprep.subr.mxu0 0.0
    %379 = vmatpush2.msra.mxu0 0.0
    %380 = vmatprep.subr.mxu0 0.0
    %381 = vmatpush2.msra.mxu0 0.0
    %382 = vmatprep.mubr.f32.mxu0 0.0
    %383 = vmatmul.mubr.f32.gmra.mxu0 %v316
    %v384 = vpop.f32.mrf.mxu0
    %v385 = vadd.f32 %v304, %v384
    %v386 = vpop.f32.mrf.mxu0
    %387 = vdwg.mxu0
    %vm388 = vcmask 257024
    %389 = vst.msk [vmem:[#allocation2] sm:$0xf] %vm388, %v385
    %v390 = vld [vmem:[%s10] sm:$0xff]
    %v391 = vld [vmem:[%s10 + $0x8] sm:$0xff]
    %v392 = vld [vmem:[%s10 + $0x10] sm:$0xff]
    %v393 = vld [vmem:[%s10 + $0x18] sm:$0xff]
    %v394 = vld [vmem:[%s11] sm:$0x1]
    %v396 = vlaneseq
    %v397 = vshrl.u32 %v396, 7
    %v398 = vsub.s32 0, %v397
    %v399 = vrot.slane %v394, %v398
    %401 = vmatprep.subr.mxu0 0.0
    %402 = vmatpush1.msra.mxu0 0.0
    %403 = vmatprep.subr.mxu0 0.0
    %404 = vmatpush1.msra.mxu0 0.0
    %405 = vmatprep.subr.mxu0 0.0
    %406 = vmatpush1.msra.mxu0 0.0
    %407 = vmatprep.subr.mxu0 0.0
    %408 = vmatpush1.msra.mxu0 0.0
    %409 = vmatprep.subr.mxu0 0.0
    %410 = vmatpush1.msra.mxu0 0.0
    %411 = vmatprep.subr.mxu0 0.0
    %412 = vmatpush1.msra.mxu0 0.0
    %413 = vmatprep.subr.mxu0 0.0
    %414 = vmatpush1.msra.mxu0 0.0
    %415 = vmatprep.subr.mxu0 0.0
    %416 = vmatpush1.msra.mxu0 0.0
    %417 = vmatprep.subr.mxu0 0.0
    %418 = vmatpush1.msra.mxu0 0.0
    %419 = vmatprep.subr.mxu0 0.0
    %420 = vmatpush1.msra.mxu0 0.0
    %421 = vmatprep.subr.mxu0 0.0
    %422 = vmatpush1.msra.mxu0 0.0
    %423 = vmatprep.subr.mxu0 0.0
    %424 = vmatpush1.msra.mxu0 0.0
    %425 = vmatprep.subr.mxu0 0.0
    %426 = vmatpush1.msra.mxu0 %v393
    %427 = vmatprep.subr.mxu0 0.0
    %428 = vmatpush1.msra.mxu0 %v392
    %429 = vmatprep.subr.mxu0 0.0
    %430 = vmatpush1.msra.mxu0 %v391
    %431 = vmatprep.subr.mxu0 0.0
    %432 = vmatpush1.msra.mxu0 %v390
    %433 = vmatprep.subr.mxu0 0.0
    %434 = vmatpush2.msra.mxu0 0.0
    %435 = vmatprep.subr.mxu0 0.0
    %436 = vmatpush2.msra.mxu0 0.0
    %437 = vmatprep.subr.mxu0 0.0
    %438 = vmatpush2.msra.mxu0 0.0
    %439 = vmatprep.subr.mxu0 0.0
    %440 = vmatpush2.msra.mxu0 0.0
    %441 = vmatprep.subr.mxu0 0.0
    %442 = vmatpush2.msra.mxu0 0.0
    %443 = vmatprep.subr.mxu0 0.0
    %444 = vmatpush2.msra.mxu0 0.0
    %445 = vmatprep.subr.mxu0 0.0
    %446 = vmatpush2.msra.mxu0 0.0
    %447 = vmatprep.subr.mxu0 0.0
    %448 = vmatpush2.msra.mxu0 0.0
    %449 = vmatprep.subr.mxu0 0.0
    %450 = vmatpush2.msra.mxu0 0.0
    %451 = vmatprep.subr.mxu0 0.0
    %452 = vmatpush2.msra.mxu0 0.0
    %453 = vmatprep.subr.mxu0 0.0
    %454 = vmatpush2.msra.mxu0 0.0
    %455 = vmatprep.subr.mxu0 0.0
    %456 = vmatpush2.msra.mxu0 0.0
    %457 = vmatprep.subr.mxu0 0.0
    %458 = vmatpush2.msra.mxu0 0.0
    %459 = vmatprep.subr.mxu0 0.0
    %460 = vmatpush2.msra.mxu0 0.0
    %461 = vmatprep.subr.mxu0 0.0
    %462 = vmatpush2.msra.mxu0 0.0
    %463 = vmatprep.subr.mxu0 0.0
    %464 = vmatpush2.msra.mxu0 0.0
    %465 = vmatprep.mubr.f32.mxu0 0.0
    %466 = vmatmul.mubr.f32.gmra.mxu0 %v316
    %v467 = vpop.f32.mrf.mxu0
    %v468 = vadd.f32 %v399, %v467
    %v469 = vpop.f32.mrf.mxu0
    %470 = vdwg.mxu0
    %471 = vst.msk [vmem:[#allocation3] sm:$0xf] %vm388, %v468
    %v472 = vlaneseq
    %v473 = vshrl.u32 %v472, 7
    %v474 = vlaneseq
    %v475 = vand.u32 %v474, 127
    %vm476 = vcmp.lt.s32.totalorder %v475, 16
    loop: start=0, step=1, limit=7
    $region78: #{tpu_custom_call.1} parent=1 // loop_pre_header
      _
    $region79: #{tpu_custom_call.1} parent=1 // loop_header
      %s478 = sphi 0, %s482
      %p479 = scmp.ge.s32.totalorder %s478, 7
    $region80: #{tpu_custom_call.1} parent=1 // loop_header_branch
      %481 = sbr.rel (%p479) target = $region84
    $region81: #{tpu_custom_call.1} parent=1 // loop_body
      %v483 = vld [vmem:[#allocation2] sm:$0xf]
      %v484 = vld [vmem:[#allocation3] sm:$0xf]
      %v485 = vld [vmem:[%s4] sm:$0xff]
      %v486 = vld [vmem:[%s4 + $0x8] sm:$0xff]
      %v487 = vld [vmem:[%s4 + $0x10] sm:$0xff]
      %v488 = vld [vmem:[%s4 + $0x18] sm:$0xff]
      %v489 = vld [vmem:[%s5] sm:$0x1]
      %v491 = vlaneseq
      %v492 = vshrl.u32 %v491, 7
      %v493 = vsub.s32 0, %v492
      %v494 = vrot.slane %v489, %v493
      %v497 = vsel %vm142, %v483, 0
      %499 = vmatprep.subr.mxu0 0.0
      %500 = vmatpush1.msra.mxu0 0.0
      %501 = vmatprep.subr.mxu0 0.0
      %502 = vmatpush1.msra.mxu0 0.0
      %503 = vmatprep.subr.mxu0 0.0
      %504 = vmatpush1.msra.mxu0 0.0
      %505 = vmatprep.subr.mxu0 0.0
      %506 = vmatpush1.msra.mxu0 0.0
      %507 = vmatprep.subr.mxu0 0.0
      %508 = vmatpush1.msra.mxu0 0.0
      %509 = vmatprep.subr.mxu0 0.0
      %510 = vmatpush1.msra.mxu0 0.0
      %511 = vmatprep.subr.mxu0 0.0
      %512 = vmatpush1.msra.mxu0 0.0
      %513 = vmatprep.subr.mxu0 0.0
      %514 = vmatpush1.msra.mxu0 0.0
      %515 = vmatprep.subr.mxu0 0.0
      %516 = vmatpush1.msra.mxu0 0.0
      %517 = vmatprep.subr.mxu0 0.0
      %518 = vmatpush1.msra.mxu0 0.0
      %519 = vmatprep.subr.mxu0 0.0
      %520 = vmatpush1.msra.mxu0 0.0
      %521 = vmatprep.subr.mxu0 0.0
      %522 = vmatpush1.msra.mxu0 0.0
      %523 = vmatprep.subr.mxu0 0.0
      %524 = vmatpush1.msra.mxu0 %v488
      %525 = vmatprep.subr.mxu0 0.0
      %526 = vmatpush1.msra.mxu0 %v487
      %527 = vmatprep.subr.mxu0 0.0
      %528 = vmatpush1.msra.mxu0 %v486
      %529 = vmatprep.subr.mxu0 0.0
      %530 = vmatpush1.msra.mxu0 %v485
      %531 = vmatprep.subr.mxu0 0.0
      %532 = vmatpush2.msra.mxu0 0.0
      %533 = vmatprep.subr.mxu0 0.0
      %534 = vmatpush2.msra.mxu0 0.0
      %535 = vmatprep.subr.mxu0 0.0
      %536 = vmatpush2.msra.mxu0 0.0
      %537 = vmatprep.subr.mxu0 0.0
      %538 = vmatpush2.msra.mxu0 0.0
      %539 = vmatprep.subr.mxu0 0.0
      %540 = vmatpush2.msra.mxu0 0.0
      %541 = vmatprep.subr.mxu0 0.0
      %542 = vmatpush2.msra.mxu0 0.0
      %543 = vmatprep.subr.mxu0 0.0
      %544 = vmatpush2.msra.mxu0 0.0
      %545 = vmatprep.subr.mxu0 0.0
      %546 = vmatpush2.msra.mxu0 0.0
      %547 = vmatprep.subr.mxu0 0.0
      %548 = vmatpush2.msra.mxu0 0.0
      %549 = vmatprep.subr.mxu0 0.0
      %550 = vmatpush2.msra.mxu0 0.0
      %551 = vmatprep.subr.mxu0 0.0
      %552 = vmatpush2.msra.mxu0 0.0
      %553 = vmatprep.subr.mxu0 0.0
      %554 = vmatpush2.msra.mxu0 0.0
      %555 = vmatprep.subr.mxu0 0.0
      %556 = vmatpush2.msra.mxu0 0.0
      %557 = vmatprep.subr.mxu0 0.0
      %558 = vmatpush2.msra.mxu0 0.0
      %559 = vmatprep.subr.mxu0 0.0
      %560 = vmatpush2.msra.mxu0 0.0
      %561 = vmatprep.subr.mxu0 0.0
      %562 = vmatpush2.msra.mxu0 0.0
      %563 = vmatprep.mubr.f32.mxu0 0.0
      %564 = vmatmul.mubr.f32.gmra.mxu0 %v497
      %v565 = vpop.f32.mrf.mxu0
      %v566 = vadd.f32 %v494, %v565
      %v567 = vpop.f32.mrf.mxu0
      %568 = vdwg.mxu0
      %v569 = vld [vmem:[%s1] sm:$0xff]
      %v570 = vld [vmem:[%s1 + $0x8] sm:$0xff]
      %v571 = vld [vmem:[%s1 + $0x10] sm:$0xff]
      %v572 = vld [vmem:[%s1 + $0x18] sm:$0xff]
      %v573 = vld [vmem:[%s1 + $0x20] sm:$0xff]
      %v574 = vld [vmem:[%s1 + $0x28] sm:$0xff]
      %v575 = vld [vmem:[%s1 + $0x30] sm:$0xff]
      %v576 = vld [vmem:[%s1 + $0x38] sm:$0xff]
      %v577 = vld [vmem:[%s1 + $0x40] sm:$0xff]
      %v578 = vld [vmem:[%s1 + $0x48] sm:$0xff]
      %v579 = vld [vmem:[%s1 + $0x50] sm:$0xff]
      %v580 = vld [vmem:[%s1 + $0x58] sm:$0xff]
      %v581 = vld [vmem:[%s1 + $0x60] sm:$0xff]
      %v582 = vld [vmem:[%s1 + $0x68] sm:$0xff]
      %v583 = vld [vmem:[%s1 + $0x70] sm:$0xff]
      %v584 = vld [vmem:[%s1 + $0x78] sm:$0xff]
      %v585 = vld [vmem:[%s1 + $0x80] sm:$0xff]
      %v586 = vld [vmem:[%s1 + $0x88] sm:$0xff]
      %v587 = vld [vmem:[%s1 + $0x90] sm:$0xff]
      %v588 = vld [vmem:[%s1 + $0x98] sm:$0xff]
      %v589 = vld [vmem:[%s1 + $0xa0] sm:$0xff]
      %v590 = vld [vmem:[%s1 + $0xa8] sm:$0xff]
      %v591 = vld [vmem:[%s1 + $0xb0] sm:$0xff]
      %v592 = vld [vmem:[%s1 + $0xb8] sm:$0xff]
      %v593 = vld [vmem:[%s1 + $0xc0] sm:$0xff]
      %v594 = vld [vmem:[%s1 + $0xc8] sm:$0xff]
      %v595 = vld [vmem:[%s1 + $0xd0] sm:$0xff]
      %v596 = vld [vmem:[%s1 + $0xd8] sm:$0xff]
      %v597 = vld [vmem:[%s1 + $0xe0] sm:$0xff]
      %v598 = vld [vmem:[%s1 + $0xe8] sm:$0xff]
      %v599 = vld [vmem:[%s1 + $0xf0] sm:$0xff]
      %v600 = vld [vmem:[%s1 + $0xf8] sm:$0xff]
      %v601 = vld [vmem:[%s1 + $0x100] sm:$0xff]
      %v602 = vld [vmem:[%s1 + $0x108] sm:$0xff]
      %v603 = vld [vmem:[%s1 + $0x110] sm:$0xff]
      %v604 = vld [vmem:[%s1 + $0x118] sm:$0xff]
      %v605 = vld [vmem:[%s1 + $0x120] sm:$0xff]
      %v606 = vld [vmem:[%s1 + $0x128] sm:$0xff]
      %v607 = vld [vmem:[%s1 + $0x130] sm:$0xff]
      %v608 = vld [vmem:[%s1 + $0x138] sm:$0xff]
      %v609 = vld [vmem:[%s1 + $0x140] sm:$0xff]
      %v610 = vld [vmem:[%s1 + $0x148] sm:$0xff]
      %v611 = vld [vmem:[%s1 + $0x150] sm:$0xff]
      %v612 = vld [vmem:[%s1 + $0x158] sm:$0xff]
      %v613 = vld [vmem:[%s1 + $0x160] sm:$0xff]
      %v614 = vld [vmem:[%s1 + $0x168] sm:$0xff]
      %v615 = vld [vmem:[%s1 + $0x170] sm:$0xff]
      %v616 = vld [vmem:[%s1 + $0x178] sm:$0xff]
      %v617 = vld [vmem:[%s1 + $0x180] sm:$0xff]
      %v618 = vld [vmem:[%s1 + $0x188] sm:$0xff]
      %v619 = vld [vmem:[%s1 + $0x190] sm:$0xff]
      %v620 = vld [vmem:[%s1 + $0x198] sm:$0xff]
      %v621 = vld [vmem:[%s1 + $0x1a0] sm:$0xff]
      %v622 = vld [vmem:[%s1 + $0x1a8] sm:$0xff]
      %v623 = vld [vmem:[%s1 + $0x1b0] sm:$0xff]
      %v624 = vld [vmem:[%s1 + $0x1b8] sm:$0xff]
      %v625 = vld [vmem:[%s1 + $0x1c0] sm:$0xff]
      %v626 = vld [vmem:[%s1 + $0x1c8] sm:$0xff]
      %v627 = vld [vmem:[%s1 + $0x1d0] sm:$0xff]
      %v628 = vld [vmem:[%s1 + $0x1d8] sm:$0xff]
      %v629 = vld [vmem:[%s1 + $0x1e0] sm:$0xff]
      %v630 = vld [vmem:[%s1 + $0x1e8] sm:$0xff]
      %v631 = vld [vmem:[%s1 + $0x1f0] sm:$0xff]
      %v632 = vld [vmem:[%s1 + $0x1f8] sm:$0xff]
      %v635 = vunpack.c.l.s4 1966171168
      %v636 = vunpack.c.0.s8 %v635
      %v637 = vlaneseq
      %v638 = vshrl.u32 %v637, 7
      %v639 = vsub.s32 %v636, %v638
      %v640 = vrot.slane %v566, %v639
      %v641 = vcombine.high %v640, %v640
      %v643 = vunpack.c.l.s4 1966171168
      %v644 = vunpack.c.0.s8 %v643
      %v645 = vlaneseq
      %v646 = vshrl.u32 %v645, 7
      %v647 = vsub.s32 %v644, %v646
      %v648 = vrot.slane %v640, %v647
      %v650 = vunpack.c.l.s4 1966171168
      %v651 = vunpack.c.0.s8 %v650
      %v652 = vlaneseq
      %v653 = vshrl.u32 %v652, 7
      %v654 = vsub.s32 %v651, %v653
      %v655 = vrot.slane %v641, %v654
      %v656 = vcombine.high %v648, %v648
      %v657 = vcombine.high %v655, %v655
      %v658 = vlaneseq
      %v659 = vshrl.u32 %v658, 7
      %v660 = vsub.s32 0, %v659
      %v661 = vrot.slane %v648, %v660
      %v662 = vlaneseq
      %v663 = vshrl.u32 %v662, 7
      %v664 = vsub.s32 0, %v663
      %v665 = vrot.slane %v655, %v664
      %v666 = vlaneseq
      %v667 = vshrl.u32 %v666, 7
      %v668 = vsub.s32 0, %v667
      %v669 = vrot.slane %v656, %v668
      %v670 = vlaneseq
      %v671 = vshrl.u32 %v670, 7
      %v672 = vsub.s32 0, %v671
      %v673 = vrot.slane %v657, %v672
      %v678 = vadd.f32 %v569, %v661
      %v679 = vadd.f32 %v570, %v661
      %v680 = vadd.f32 %v571, %v661
      %v681 = vadd.f32 %v572, %v661
      %v682 = vadd.f32 %v573, %v661
      %v683 = vadd.f32 %v574, %v661
      %v684 = vadd.f32 %v575, %v661
      %v685 = vadd.f32 %v576, %v661
      %v686 = vadd.f32 %v577, %v661
      %v687 = vadd.f32 %v578, %v661
      %v688 = vadd.f32 %v579, %v661
      %v689 = vadd.f32 %v580, %v661
      %v690 = vadd.f32 %v581, %v661
      %v691 = vadd.f32 %v582, %v661
      %v692 = vadd.f32 %v583, %v661
      %v693 = vadd.f32 %v584, %v661
      %v694 = vadd.f32 %v585, %v665
      %v695 = vadd.f32 %v586, %v665
      %v696 = vadd.f32 %v587, %v665
      %v697 = vadd.f32 %v588, %v665
      %v698 = vadd.f32 %v589, %v665
      %v699 = vadd.f32 %v590, %v665
      %v700 = vadd.f32 %v591, %v665
      %v701 = vadd.f32 %v592, %v665
      %v702 = vadd.f32 %v593, %v665
      %v703 = vadd.f32 %v594, %v665
      %v704 = vadd.f32 %v595, %v665
      %v705 = vadd.f32 %v596, %v665
      %v706 = vadd.f32 %v597, %v665
      %v707 = vadd.f32 %v598, %v665
      %v708 = vadd.f32 %v599, %v665
      %v709 = vadd.f32 %v600, %v665
      %v710 = vadd.f32 %v601, %v669
      %v711 = vadd.f32 %v602, %v669
      %v712 = vadd.f32 %v603, %v669
      %v713 = vadd.f32 %v604, %v669
      %v714 = vadd.f32 %v605, %v669
      %v715 = vadd.f32 %v606, %v669
      %v716 = vadd.f32 %v607, %v669
      %v717 = vadd.f32 %v608, %v669
      %v718 = vadd.f32 %v609, %v669
      %v719 = vadd.f32 %v610, %v669
      %v720 = vadd.f32 %v611, %v669
      %v721 = vadd.f32 %v612, %v669
      %v722 = vadd.f32 %v613, %v669
      %v723 = vadd.f32 %v614, %v669
      %v724 = vadd.f32 %v615, %v669
      %v725 = vadd.f32 %v616, %v669
      %v726 = vadd.f32 %v617, %v673
      %v727 = vadd.f32 %v618, %v673
      %v728 = vadd.f32 %v619, %v673
      %v729 = vadd.f32 %v620, %v673
      %v730 = vadd.f32 %v621, %v673
      %v731 = vadd.f32 %v622, %v673
      %v732 = vadd.f32 %v623, %v673
      %v733 = vadd.f32 %v624, %v673
      %v734 = vadd.f32 %v625, %v673
      %v735 = vadd.f32 %v626, %v673
      %v736 = vadd.f32 %v627, %v673
      %v737 = vadd.f32 %v628, %v673
      %v738 = vadd.f32 %v629, %v673
      %v739 = vadd.f32 %v630, %v673
      %v740 = vadd.f32 %v631, %v673
      %v741 = vadd.f32 %v632, %v673
      %v742 = vmax.f32 %v678, 0.0
      %v743 = vmax.f32 %v679, 0.0
      %v744 = vmax.f32 %v680, 0.0
      %v745 = vmax.f32 %v681, 0.0
      %v746 = vmax.f32 %v682, 0.0
      %v747 = vmax.f32 %v683, 0.0
      %v748 = vmax.f32 %v684, 0.0
      %v749 = vmax.f32 %v685, 0.0
      %v750 = vmax.f32 %v686, 0.0
      %v751 = vmax.f32 %v687, 0.0
      %v752 = vmax.f32 %v688, 0.0
      %v753 = vmax.f32 %v689, 0.0
      %v754 = vmax.f32 %v690, 0.0
      %v755 = vmax.f32 %v691, 0.0
      %v756 = vmax.f32 %v692, 0.0
      %v757 = vmax.f32 %v693, 0.0
      %v758 = vmax.f32 %v694, 0.0
      %v759 = vmax.f32 %v695, 0.0
      %v760 = vmax.f32 %v696, 0.0
      %v761 = vmax.f32 %v697, 0.0
      %v762 = vmax.f32 %v698, 0.0
      %v763 = vmax.f32 %v699, 0.0
      %v764 = vmax.f32 %v700, 0.0
      %v765 = vmax.f32 %v701, 0.0
      %v766 = vmax.f32 %v702, 0.0
      %v767 = vmax.f32 %v703, 0.0
      %v768 = vmax.f32 %v704, 0.0
      %v769 = vmax.f32 %v705, 0.0
      %v770 = vmax.f32 %v706, 0.0
      %v771 = vmax.f32 %v707, 0.0
      %v772 = vmax.f32 %v708, 0.0
      %v773 = vmax.f32 %v709, 0.0
      %v774 = vmax.f32 %v710, 0.0
      %v775 = vmax.f32 %v711, 0.0
      %v776 = vmax.f32 %v712, 0.0
      %v777 = vmax.f32 %v713, 0.0
      %v778 = vmax.f32 %v714, 0.0
      %v779 = vmax.f32 %v715, 0.0
      %v780 = vmax.f32 %v716, 0.0
      %v781 = vmax.f32 %v717, 0.0
      %v782 = vmax.f32 %v718, 0.0
      %v783 = vmax.f32 %v719, 0.0
      %v784 = vmax.f32 %v720, 0.0
      %v785 = vmax.f32 %v721, 0.0
      %v786 = vmax.f32 %v722, 0.0
      %v787 = vmax.f32 %v723, 0.0
      %v788 = vmax.f32 %v724, 0.0
      %v789 = vmax.f32 %v725, 0.0
      %v790 = vmax.f32 %v726, 0.0
      %v791 = vmax.f32 %v727, 0.0
      %v792 = vmax.f32 %v728, 0.0
      %v793 = vmax.f32 %v729, 0.0
      %v794 = vmax.f32 %v730, 0.0
      %v795 = vmax.f32 %v731, 0.0
      %v796 = vmax.f32 %v732, 0.0
      %v797 = vmax.f32 %v733, 0.0
      %v798 = vmax.f32 %v734, 0.0
      %v799 = vmax.f32 %v735, 0.0
      %v800 = vmax.f32 %v736, 0.0
      %v801 = vmax.f32 %v737, 0.0
      %v802 = vmax.f32 %v738, 0.0
      %v803 = vmax.f32 %v739, 0.0
      %v804 = vmax.f32 %v740, 0.0
      %v805 = vmax.f32 %v741, 0.0
      %v806 = vld [vmem:[%s6] sm:$0x1]
      %v808 = vlaneseq
      %v809 = vshrl.u32 %v808, 7
      %v810 = vsub.s32 0, %v809
      %v811 = vrot.slane %v806, %v810
      %v813 = vmul.f32 %v742, %v811
      %v814 = vmul.f32 %v743, %v811
      %v815 = vmul.f32 %v744, %v811
      %v816 = vmul.f32 %v745, %v811
      %v817 = vmul.f32 %v746, %v811
      %v818 = vmul.f32 %v747, %v811
      %v819 = vmul.f32 %v748, %v811
      %v820 = vmul.f32 %v749, %v811
      %v821 = vmul.f32 %v750, %v811
      %v822 = vmul.f32 %v751, %v811
      %v823 = vmul.f32 %v752, %v811
      %v824 = vmul.f32 %v753, %v811
      %v825 = vmul.f32 %v754, %v811
      %v826 = vmul.f32 %v755, %v811
      %v827 = vmul.f32 %v756, %v811
      %v828 = vmul.f32 %v757, %v811
      %v829 = vmul.f32 %v758, %v811
      %v830 = vmul.f32 %v759, %v811
      %v831 = vmul.f32 %v760, %v811
      %v832 = vmul.f32 %v761, %v811
      %v833 = vmul.f32 %v762, %v811
      %v834 = vmul.f32 %v763, %v811
      %v835 = vmul.f32 %v764, %v811
      %v836 = vmul.f32 %v765, %v811
      %v837 = vmul.f32 %v766, %v811
      %v838 = vmul.f32 %v767, %v811
      %v839 = vmul.f32 %v768, %v811
      %v840 = vmul.f32 %v769, %v811
      %v841 = vmul.f32 %v770, %v811
      %v842 = vmul.f32 %v771, %v811
      %v843 = vmul.f32 %v772, %v811
      %v844 = vmul.f32 %v773, %v811
      %v845 = vmul.f32 %v774, %v811
      %v846 = vmul.f32 %v775, %v811
      %v847 = vmul.f32 %v776, %v811
      %v848 = vmul.f32 %v777, %v811
      %v849 = vmul.f32 %v778, %v811
      %v850 = vmul.f32 %v779, %v811
      %v851 = vmul.f32 %v780, %v811
      %v852 = vmul.f32 %v781, %v811
      %v853 = vmul.f32 %v782, %v811
      %v854 = vmul.f32 %v783, %v811
      %v855 = vmul.f32 %v784, %v811
      %v856 = vmul.f32 %v785, %v811
      %v857 = vmul.f32 %v786, %v811
      %v858 = vmul.f32 %v787, %v811
      %v859 = vmul.f32 %v788, %v811
      %v860 = vmul.f32 %v789, %v811
      %v861 = vmul.f32 %v790, %v811
      %v862 = vmul.f32 %v791, %v811
      %v863 = vmul.f32 %v792, %v811
      %v864 = vmul.f32 %v793, %v811
      %v865 = vmul.f32 %v794, %v811
      %v866 = vmul.f32 %v795, %v811
      %v867 = vmul.f32 %v796, %v811
      %v868 = vmul.f32 %v797, %v811
      %v869 = vmul.f32 %v798, %v811
      %v870 = vmul.f32 %v799, %v811
      %v871 = vmul.f32 %v800, %v811
      %v872 = vmul.f32 %v801, %v811
      %v873 = vmul.f32 %v802, %v811
      %v874 = vmul.f32 %v803, %v811
      %v875 = vmul.f32 %v804, %v811
      %v876 = vmul.f32 %v805, %v811
      %v877 = vsel %vm142, %v813, 0.0
      %878 = vadd.xlane.f32.xlu0 %v877
      %v879 = vpop.xlane.xlu0 %878
      %v880 = vsel %vm142, %v814, 0.0
      %881 = vadd.xlane.f32.xlu0 %v880
      %v882 = vpop.xlane.xlu0 %881
      %v883 = vsel %vm142, %v815, 0.0
      %884 = vadd.xlane.f32.xlu0 %v883
      %v885 = vpop.xlane.xlu0 %884
      %v886 = vsel %vm142, %v816, 0.0
      %887 = vadd.xlane.f32.xlu0 %v886
      %v888 = vpop.xlane.xlu0 %887
      %v889 = vsel %vm142, %v817, 0.0
      %890 = vadd.xlane.f32.xlu0 %v889
      %v891 = vpop.xlane.xlu0 %890
      %v892 = vsel %vm142, %v818, 0.0
      %893 = vadd.xlane.f32.xlu0 %v892
      %v894 = vpop.xlane.xlu0 %893
      %v895 = vsel %vm142, %v819, 0.0
      %896 = vadd.xlane.f32.xlu0 %v895
      %v897 = vpop.xlane.xlu0 %896
      %v898 = vsel %vm142, %v820, 0.0
      %899 = vadd.xlane.f32.xlu0 %v898
      %v900 = vpop.xlane.xlu0 %899
      %v901 = vsel %vm142, %v821, 0.0
      %902 = vadd.xlane.f32.xlu0 %v901
      %v903 = vpop.xlane.xlu0 %902
      %v904 = vsel %vm142, %v822, 0.0
      %905 = vadd.xlane.f32.xlu0 %v904
      %v906 = vpop.xlane.xlu0 %905
      %v907 = vsel %vm142, %v823, 0.0
      %908 = vadd.xlane.f32.xlu0 %v907
      %v909 = vpop.xlane.xlu0 %908
      %v910 = vsel %vm142, %v824, 0.0
      %911 = vadd.xlane.f32.xlu0 %v910
      %v912 = vpop.xlane.xlu0 %911
      %v913 = vsel %vm142, %v825, 0.0
      %914 = vadd.xlane.f32.xlu0 %v913
      %v915 = vpop.xlane.xlu0 %914
      %v916 = vsel %vm142, %v826, 0.0
      %917 = vadd.xlane.f32.xlu0 %v916
      %v918 = vpop.xlane.xlu0 %917
      %v919 = vsel %vm142, %v827, 0.0
      %920 = vadd.xlane.f32.xlu0 %v919
      %v921 = vpop.xlane.xlu0 %920
      %v922 = vsel %vm142, %v828, 0.0
      %923 = vadd.xlane.f32.xlu0 %v922
      %v924 = vpop.xlane.xlu0 %923
      %v925 = vsel %vm142, %v829, 0.0
      %926 = vadd.xlane.f32.xlu0 %v925
      %v927 = vpop.xlane.xlu0 %926
      %v928 = vsel %vm142, %v830, 0.0
      %929 = vadd.xlane.f32.xlu0 %v928
      %v930 = vpop.xlane.xlu0 %929
      %v931 = vsel %vm142, %v831, 0.0
      %932 = vadd.xlane.f32.xlu0 %v931
      %v933 = vpop.xlane.xlu0 %932
      %v934 = vsel %vm142, %v832, 0.0
      %935 = vadd.xlane.f32.xlu0 %v934
      %v936 = vpop.xlane.xlu0 %935
      %v937 = vsel %vm142, %v833, 0.0
      %938 = vadd.xlane.f32.xlu0 %v937
      %v939 = vpop.xlane.xlu0 %938
      %v940 = vsel %vm142, %v834, 0.0
      %941 = vadd.xlane.f32.xlu0 %v940
      %v942 = vpop.xlane.xlu0 %941
      %v943 = vsel %vm142, %v835, 0.0
      %944 = vadd.xlane.f32.xlu0 %v943
      %v945 = vpop.xlane.xlu0 %944
      %v946 = vsel %vm142, %v836, 0.0
      %947 = vadd.xlane.f32.xlu0 %v946
      %v948 = vpop.xlane.xlu0 %947
      %v949 = vsel %vm142, %v837, 0.0
      %950 = vadd.xlane.f32.xlu0 %v949
      %v951 = vpop.xlane.xlu0 %950
      %v952 = vsel %vm142, %v838, 0.0
      %953 = vadd.xlane.f32.xlu0 %v952
      %v954 = vpop.xlane.xlu0 %953
      %v955 = vsel %vm142, %v839, 0.0
      %956 = vadd.xlane.f32.xlu0 %v955
      %v957 = vpop.xlane.xlu0 %956
      %v958 = vsel %vm142, %v840, 0.0
      %959 = vadd.xlane.f32.xlu0 %v958
      %v960 = vpop.xlane.xlu0 %959
      %v961 = vsel %vm142, %v841, 0.0
      %962 = vadd.xlane.f32.xlu0 %v961
      %v963 = vpop.xlane.xlu0 %962
      %v964 = vsel %vm142, %v842, 0.0
      %965 = vadd.xlane.f32.xlu0 %v964
      %v966 = vpop.xlane.xlu0 %965
      %v967 = vsel %vm142, %v843, 0.0
      %968 = vadd.xlane.f32.xlu0 %v967
      %v969 = vpop.xlane.xlu0 %968
      %v970 = vsel %vm142, %v844, 0.0
      %971 = vadd.xlane.f32.xlu0 %v970
      %v972 = vpop.xlane.xlu0 %971
      %v973 = vsel %vm142, %v845, 0.0
      %974 = vadd.xlane.f32.xlu0 %v973
      %v975 = vpop.xlane.xlu0 %974
      %v976 = vsel %vm142, %v846, 0.0
      %977 = vadd.xlane.f32.xlu0 %v976
      %v978 = vpop.xlane.xlu0 %977
      %v979 = vsel %vm142, %v847, 0.0
      %980 = vadd.xlane.f32.xlu0 %v979
      %v981 = vpop.xlane.xlu0 %980
      %v982 = vsel %vm142, %v848, 0.0
      %983 = vadd.xlane.f32.xlu0 %v982
      %v984 = vpop.xlane.xlu0 %983
      %v985 = vsel %vm142, %v849, 0.0
      %986 = vadd.xlane.f32.xlu0 %v985
      %v987 = vpop.xlane.xlu0 %986
      %v988 = vsel %vm142, %v850, 0.0
      %989 = vadd.xlane.f32.xlu0 %v988
      %v990 = vpop.xlane.xlu0 %989
      %v991 = vsel %vm142, %v851, 0.0
      %992 = vadd.xlane.f32.xlu0 %v991
      %v993 = vpop.xlane.xlu0 %992
      %v994 = vsel %vm142, %v852, 0.0
      %995 = vadd.xlane.f32.xlu0 %v994
      %v996 = vpop.xlane.xlu0 %995
      %v997 = vsel %vm142, %v853, 0.0
      %998 = vadd.xlane.f32.xlu0 %v997
      %v999 = vpop.xlane.xlu0 %998
      %v1000 = vsel %vm142, %v854, 0.0
      %1001 = vadd.xlane.f32.xlu0 %v1000
      %v1002 = vpop.xlane.xlu0 %1001
      %v1003 = vsel %vm142, %v855, 0.0
      %1004 = vadd.xlane.f32.xlu0 %v1003
      %v1005 = vpop.xlane.xlu0 %1004
      %v1006 = vsel %vm142, %v856, 0.0
      %1007 = vadd.xlane.f32.xlu0 %v1006
      %v1008 = vpop.xlane.xlu0 %1007
      %v1009 = vsel %vm142, %v857, 0.0
      %1010 = vadd.xlane.f32.xlu0 %v1009
      %v1011 = vpop.xlane.xlu0 %1010
      %v1012 = vsel %vm142, %v858, 0.0
      %1013 = vadd.xlane.f32.xlu0 %v1012
      %v1014 = vpop.xlane.xlu0 %1013
      %v1015 = vsel %vm142, %v859, 0.0
      %1016 = vadd.xlane.f32.xlu0 %v1015
      %v1017 = vpop.xlane.xlu0 %1016
      %v1018 = vsel %vm142, %v860, 0.0
      %1019 = vadd.xlane.f32.xlu0 %v1018
      %v1020 = vpop.xlane.xlu0 %1019
      %v1021 = vsel %vm142, %v861, 0.0
      %1022 = vadd.xlane.f32.xlu0 %v1021
      %v1023 = vpop.xlane.xlu0 %1022
      %v1024 = vsel %vm142, %v862, 0.0
      %1025 = vadd.xlane.f32.xlu0 %v1024
      %v1026 = vpop.xlane.xlu0 %1025
      %v1027 = vsel %vm142, %v863, 0.0
      %1028 = vadd.xlane.f32.xlu0 %v1027
      %v1029 = vpop.xlane.xlu0 %1028
      %v1030 = vsel %vm142, %v864, 0.0
      %1031 = vadd.xlane.f32.xlu0 %v1030
      %v1032 = vpop.xlane.xlu0 %1031
      %v1033 = vsel %vm142, %v865, 0.0
      %1034 = vadd.xlane.f32.xlu0 %v1033
      %v1035 = vpop.xlane.xlu0 %1034
      %v1036 = vsel %vm142, %v866, 0.0
      %1037 = vadd.xlane.f32.xlu0 %v1036
      %v1038 = vpop.xlane.xlu0 %1037
      %v1039 = vsel %vm142, %v867, 0.0
      %1040 = vadd.xlane.f32.xlu0 %v1039
      %v1041 = vpop.xlane.xlu0 %1040
      %v1042 = vsel %vm142, %v868, 0.0
      %1043 = vadd.xlane.f32.xlu0 %v1042
      %v1044 = vpop.xlane.xlu0 %1043
      %v1045 = vsel %vm142, %v869, 0.0
      %1046 = vadd.xlane.f32.xlu0 %v1045
      %v1047 = vpop.xlane.xlu0 %1046
      %v1048 = vsel %vm142, %v870, 0.0
      %1049 = vadd.xlane.f32.xlu0 %v1048
      %v1050 = vpop.xlane.xlu0 %1049
      %v1051 = vsel %vm142, %v871, 0.0
      %1052 = vadd.xlane.f32.xlu0 %v1051
      %v1053 = vpop.xlane.xlu0 %1052
      %v1054 = vsel %vm142, %v872, 0.0
      %1055 = vadd.xlane.f32.xlu0 %v1054
      %v1056 = vpop.xlane.xlu0 %1055
      %v1057 = vsel %vm142, %v873, 0.0
      %1058 = vadd.xlane.f32.xlu0 %v1057
      %v1059 = vpop.xlane.xlu0 %1058
      %v1060 = vsel %vm142, %v874, 0.0
      %1061 = vadd.xlane.f32.xlu0 %v1060
      %v1062 = vpop.xlane.xlu0 %1061
      %v1063 = vsel %vm142, %v875, 0.0
      %1064 = vadd.xlane.f32.xlu0 %v1063
      %v1065 = vpop.xlane.xlu0 %1064
      %v1066 = vsel %vm142, %v876, 0.0
      %1067 = vadd.xlane.f32.xlu0 %v1066
      %v1068 = vpop.xlane.xlu0 %1067
      %v1069 = vld [vmem:[#allocation4] sm:$0x1]
      %v1071 = vlaneseq
      %v1072 = vshrl.u32 %v1071, 7
      %v1073 = vsub.s32 0, %v1072
      %v1074 = vrot.slane %v1069, %v1073
      %1075 = vset.pattern.permute.xlu0 0
      %1076 = vperm.xlu0 %1075, %v1074
      %v1077 = vpop.permute.xlu0 %1076
      %v1079 = vadd.f32 %v879, %v1077
      %v1080 = vadd.f32 %v882, %v1077
      %v1081 = vadd.f32 %v885, %v1077
      %v1082 = vadd.f32 %v888, %v1077
      %v1083 = vadd.f32 %v891, %v1077
      %v1084 = vadd.f32 %v894, %v1077
      %v1085 = vadd.f32 %v897, %v1077
      %v1086 = vadd.f32 %v900, %v1077
      %v1087 = vadd.f32 %v903, %v1077
      %v1088 = vadd.f32 %v906, %v1077
      %v1089 = vadd.f32 %v909, %v1077
      %v1090 = vadd.f32 %v912, %v1077
      %v1091 = vadd.f32 %v915, %v1077
      %v1092 = vadd.f32 %v918, %v1077
      %v1093 = vadd.f32 %v921, %v1077
      %v1094 = vadd.f32 %v924, %v1077
      %v1095 = vadd.f32 %v927, %v1077
      %v1096 = vadd.f32 %v930, %v1077
      %v1097 = vadd.f32 %v933, %v1077
      %v1098 = vadd.f32 %v936, %v1077
      %v1099 = vadd.f32 %v939, %v1077
      %v1100 = vadd.f32 %v942, %v1077
      %v1101 = vadd.f32 %v945, %v1077
      %v1102 = vadd.f32 %v948, %v1077
      %v1103 = vadd.f32 %v951, %v1077
      %v1104 = vadd.f32 %v954, %v1077
      %v1105 = vadd.f32 %v957, %v1077
      %v1106 = vadd.f32 %v960, %v1077
      %v1107 = vadd.f32 %v963, %v1077
      %v1108 = vadd.f32 %v966, %v1077
      %v1109 = vadd.f32 %v969, %v1077
      %v1110 = vadd.f32 %v972, %v1077
      %v1111 = vadd.f32 %v975, %v1077
      %v1112 = vadd.f32 %v978, %v1077
      %v1113 = vadd.f32 %v981, %v1077
      %v1114 = vadd.f32 %v984, %v1077
      %v1115 = vadd.f32 %v987, %v1077
      %v1116 = vadd.f32 %v990, %v1077
      %v1117 = vadd.f32 %v993, %v1077
      %v1118 = vadd.f32 %v996, %v1077
      %v1119 = vadd.f32 %v999, %v1077
      %v1120 = vadd.f32 %v1002, %v1077
      %v1121 = vadd.f32 %v1005, %v1077
      %v1122 = vadd.f32 %v1008, %v1077
      %v1123 = vadd.f32 %v1011, %v1077
      %v1124 = vadd.f32 %v1014, %v1077
      %v1125 = vadd.f32 %v1017, %v1077
      %v1126 = vadd.f32 %v1020, %v1077
      %v1127 = vadd.f32 %v1023, %v1077
      %v1128 = vadd.f32 %v1026, %v1077
      %v1129 = vadd.f32 %v1029, %v1077
      %v1130 = vadd.f32 %v1032, %v1077
      %v1131 = vadd.f32 %v1035, %v1077
      %v1132 = vadd.f32 %v1038, %v1077
      %v1133 = vadd.f32 %v1041, %v1077
      %v1134 = vadd.f32 %v1044, %v1077
      %v1135 = vadd.f32 %v1047, %v1077
      %v1136 = vadd.f32 %v1050, %v1077
      %v1137 = vadd.f32 %v1053, %v1077
      %v1138 = vadd.f32 %v1056, %v1077
      %v1139 = vadd.f32 %v1059, %v1077
      %v1140 = vadd.f32 %v1062, %v1077
      %v1141 = vadd.f32 %v1065, %v1077
      %v1142 = vadd.f32 %v1068, %v1077
      %v1143 = vsel %vm476, 1, 0
      %vm1144 = vcmp.eq.s32.totalorder %v1143, 1
      %v1209 = vlaneseq
      %v1210 = vshrl.u32 %v1209, 7
      %v1211 = vsub.s32 %v475, %v1210
      %v1212 = vrot.slane %v1079, %v1211
      %v1213 = vadd.s32 %v475, 4294967288
      %v1214 = vlaneseq
      %v1215 = vshrl.u32 %v1214, 7
      %v1216 = vsub.s32 %v1213, %v1215
      %v1217 = vrot.slane %v1080, %v1216
      %vm1218 = vcmask 130112
      %v1219 = vsel %vm1218, %v1217, %v1212
      %v1220 = vadd.s32 %v475, 4294967280
      %v1221 = vlaneseq
      %v1222 = vshrl.u32 %v1221, 7
      %v1223 = vsub.s32 %v1220, %v1222
      %v1224 = vrot.slane %v1081, %v1223
      %vm1225 = vcmask 195712
      %v1226 = vsel %vm1225, %v1224, %v1219
      %v1227 = vadd.s32 %v475, 4294967272
      %v1228 = vlaneseq
      %v1229 = vshrl.u32 %v1228, 7
      %v1230 = vsub.s32 %v1227, %v1229
      %v1231 = vrot.slane %v1082, %v1230
      %vm1232 = vcmask 261312
      %v1233 = vsel %vm1232, %v1231, %v1226
      %v1234 = vadd.s32 %v475, 4294967264
      %v1235 = vlaneseq
      %v1236 = vshrl.u32 %v1235, 7
      %v1237 = vsub.s32 %v1234, %v1236
      %v1238 = vrot.slane %v1083, %v1237
      %vm1239 = vcmask 326912
      %v1240 = vsel %vm1239, %v1238, %v1233
      %v1241 = vadd.s32 %v475, 4294967256
      %v1242 = vlaneseq
      %v1243 = vshrl.u32 %v1242, 7
      %v1244 = vsub.s32 %v1241, %v1243
      %v1245 = vrot.slane %v1084, %v1244
      %vm1246 = vcmask 392512
      %v1247 = vsel %vm1246, %v1245, %v1240
      %v1248 = vadd.s32 %v475, 4294967248
      %v1249 = vlaneseq
      %v1250 = vshrl.u32 %v1249, 7
      %v1251 = vsub.s32 %v1248, %v1250
      %v1252 = vrot.slane %v1085, %v1251
      %vm1253 = vcmask 458112
      %v1254 = vsel %vm1253, %v1252, %v1247
      %v1255 = vadd.s32 %v475, 4294967240
      %v1256 = vlaneseq
      %v1257 = vshrl.u32 %v1256, 7
      %v1258 = vsub.s32 %v1255, %v1257
      %v1259 = vrot.slane %v1086, %v1258
      %vm1260 = vcmask 523712
      %v1261 = vsel %vm1260, %v1259, %v1254
      %v1262 = vadd.s32 %v475, 4294967232
      %v1263 = vlaneseq
      %v1264 = vshrl.u32 %v1263, 7
      %v1265 = vsub.s32 %v1262, %v1264
      %v1266 = vrot.slane %v1087, %v1265
      %vm1267 = vcmask 589312
      %v1268 = vsel %vm1267, %v1266, %v1261
      %v1269 = vadd.s32 %v475, 4294967224
      %v1270 = vlaneseq
      %v1271 = vshrl.u32 %v1270, 7
      %v1272 = vsub.s32 %v1269, %v1271
      %v1273 = vrot.slane %v1088, %v1272
      %vm1274 = vcmask 654912
      %v1275 = vsel %vm1274, %v1273, %v1268
      %v1276 = vadd.s32 %v475, 4294967216
      %v1277 = vlaneseq
      %v1278 = vshrl.u32 %v1277, 7
      %v1279 = vsub.s32 %v1276, %v1278
      %v1280 = vrot.slane %v1089, %v1279
      %vm1281 = vcmask 720512
      %v1282 = vsel %vm1281, %v1280, %v1275
      %v1283 = vadd.s32 %v475, 4294967208
      %v1284 = vlaneseq
      %v1285 = vshrl.u32 %v1284, 7
      %v1286 = vsub.s32 %v1283, %v1285
      %v1287 = vrot.slane %v1090, %v1286
      %vm1288 = vcmask 786112
      %v1289 = vsel %vm1288, %v1287, %v1282
      %v1290 = vadd.s32 %v475, 4294967200
      %v1291 = vlaneseq
      %v1292 = vshrl.u32 %v1291, 7
      %v1293 = vsub.s32 %v1290, %v1292
      %v1294 = vrot.slane %v1091, %v1293
      %vm1295 = vcmask 851712
      %v1296 = vsel %vm1295, %v1294, %v1289
      %v1297 = vadd.s32 %v475, 4294967192
      %v1298 = vlaneseq
      %v1299 = vshrl.u32 %v1298, 7
      %v1300 = vsub.s32 %v1297, %v1299
      %v1301 = vrot.slane %v1092, %v1300
      %vm1302 = vcmask 917312
      %v1303 = vsel %vm1302, %v1301, %v1296
      %v1304 = vadd.s32 %v475, 4294967184
      %v1305 = vlaneseq
      %v1306 = vshrl.u32 %v1305, 7
      %v1307 = vsub.s32 %v1304, %v1306
      %v1308 = vrot.slane %v1093, %v1307
      %vm1309 = vcmask 982912
      %v1310 = vsel %vm1309, %v1308, %v1303
      %v1311 = vadd.s32 %v475, 4294967176
      %v1312 = vlaneseq
      %v1313 = vshrl.u32 %v1312, 7
      %v1314 = vsub.s32 %v1311, %v1313
      %v1315 = vrot.slane %v1094, %v1314
      %vm1316 = vcmask 1048512
      %v1317 = vsel %vm1316, %v1315, %v1310
      %v1318 = vlaneseq
      %v1319 = vshrl.u32 %v1318, 7
      %v1320 = vsub.s32 %v475, %v1319
      %v1321 = vrot.slane %v1095, %v1320
      %v1322 = vlaneseq
      %v1323 = vshrl.u32 %v1322, 7
      %v1324 = vsub.s32 %v1213, %v1323
      %v1325 = vrot.slane %v1096, %v1324
      %v1326 = vsel %vm1218, %v1325, %v1321
      %v1327 = vlaneseq
      %v1328 = vshrl.u32 %v1327, 7
      %v1329 = vsub.s32 %v1220, %v1328
      %v1330 = vrot.slane %v1097, %v1329
      %v1331 = vsel %vm1225, %v1330, %v1326
      %v1332 = vlaneseq
      %v1333 = vshrl.u32 %v1332, 7
      %v1334 = vsub.s32 %v1227, %v1333
      %v1335 = vrot.slane %v1098, %v1334
      %v1336 = vsel %vm1232, %v1335, %v1331
      %v1337 = vlaneseq
      %v1338 = vshrl.u32 %v1337, 7
      %v1339 = vsub.s32 %v1234, %v1338
      %v1340 = vrot.slane %v1099, %v1339
      %v1341 = vsel %vm1239, %v1340, %v1336
      %v1342 = vlaneseq
      %v1343 = vshrl.u32 %v1342, 7
      %v1344 = vsub.s32 %v1241, %v1343
      %v1345 = vrot.slane %v1100, %v1344
      %v1346 = vsel %vm1246, %v1345, %v1341
      %v1347 = vlaneseq
      %v1348 = vshrl.u32 %v1347, 7
      %v1349 = vsub.s32 %v1248, %v1348
      %v1350 = vrot.slane %v1101, %v1349
      %v1351 = vsel %vm1253, %v1350, %v1346
      %v1352 = vlaneseq
      %v1353 = vshrl.u32 %v1352, 7
      %v1354 = vsub.s32 %v1255, %v1353
      %v1355 = vrot.slane %v1102, %v1354
      %v1356 = vsel %vm1260, %v1355, %v1351
      %v1357 = vlaneseq
      %v1358 = vshrl.u32 %v1357, 7
      %v1359 = vsub.s32 %v1262, %v1358
      %v1360 = vrot.slane %v1103, %v1359
      %v1361 = vsel %vm1267, %v1360, %v1356
      %v1362 = vlaneseq
      %v1363 = vshrl.u32 %v1362, 7
      %v1364 = vsub.s32 %v1269, %v1363
      %v1365 = vrot.slane %v1104, %v1364
      %v1366 = vsel %vm1274, %v1365, %v1361
      %v1367 = vlaneseq
      %v1368 = vshrl.u32 %v1367, 7
      %v1369 = vsub.s32 %v1276, %v1368
      %v1370 = vrot.slane %v1105, %v1369
      %v1371 = vsel %vm1281, %v1370, %v1366
      %v1372 = vlaneseq
      %v1373 = vshrl.u32 %v1372, 7
      %v1374 = vsub.s32 %v1283, %v1373
      %v1375 = vrot.slane %v1106, %v1374
      %v1376 = vsel %vm1288, %v1375, %v1371
      %v1377 = vlaneseq
      %v1378 = vshrl.u32 %v1377, 7
      %v1379 = vsub.s32 %v1290, %v1378
      %v1380 = vrot.slane %v1107, %v1379
      %v1381 = vsel %vm1295, %v1380, %v1376
      %v1382 = vlaneseq
      %v1383 = vshrl.u32 %v1382, 7
      %v1384 = vsub.s32 %v1297, %v1383
      %v1385 = vrot.slane %v1108, %v1384
      %v1386 = vsel %vm1302, %v1385, %v1381
      %v1387 = vlaneseq
      %v1388 = vshrl.u32 %v1387, 7
      %v1389 = vsub.s32 %v1304, %v1388
      %v1390 = vrot.slane %v1109, %v1389
      %v1391 = vsel %vm1309, %v1390, %v1386
      %v1392 = vlaneseq
      %v1393 = vshrl.u32 %v1392, 7
      %v1394 = vsub.s32 %v1311, %v1393
      %v1395 = vrot.slane %v1110, %v1394
      %v1396 = vsel %vm1316, %v1395, %v1391
      %v1397 = vlaneseq
      %v1398 = vshrl.u32 %v1397, 7
      %v1399 = vsub.s32 %v475, %v1398
      %v1400 = vrot.slane %v1111, %v1399
      %v1401 = vlaneseq
      %v1402 = vshrl.u32 %v1401, 7
      %v1403 = vsub.s32 %v1213, %v1402
      %v1404 = vrot.slane %v1112, %v1403
      %v1405 = vsel %vm1218, %v1404, %v1400
      %v1406 = vlaneseq
      %v1407 = vshrl.u32 %v1406, 7
      %v1408 = vsub.s32 %v1220, %v1407
      %v1409 = vrot.slane %v1113, %v1408
      %v1410 = vsel %vm1225, %v1409, %v1405
      %v1411 = vlaneseq
      %v1412 = vshrl.u32 %v1411, 7
      %v1413 = vsub.s32 %v1227, %v1412
      %v1414 = vrot.slane %v1114, %v1413
      %v1415 = vsel %vm1232, %v1414, %v1410
      %v1416 = vlaneseq
      %v1417 = vshrl.u32 %v1416, 7
      %v1418 = vsub.s32 %v1234, %v1417
      %v1419 = vrot.slane %v1115, %v1418
      %v1420 = vsel %vm1239, %v1419, %v1415
      %v1421 = vlaneseq
      %v1422 = vshrl.u32 %v1421, 7
      %v1423 = vsub.s32 %v1241, %v1422
      %v1424 = vrot.slane %v1116, %v1423
      %v1425 = vsel %vm1246, %v1424, %v1420
      %v1426 = vlaneseq
      %v1427 = vshrl.u32 %v1426, 7
      %v1428 = vsub.s32 %v1248, %v1427
      %v1429 = vrot.slane %v1117, %v1428
      %v1430 = vsel %vm1253, %v1429, %v1425
      %v1431 = vlaneseq
      %v1432 = vshrl.u32 %v1431, 7
      %v1433 = vsub.s32 %v1255, %v1432
      %v1434 = vrot.slane %v1118, %v1433
      %v1435 = vsel %vm1260, %v1434, %v1430
      %v1436 = vlaneseq
      %v1437 = vshrl.u32 %v1436, 7
      %v1438 = vsub.s32 %v1262, %v1437
      %v1439 = vrot.slane %v1119, %v1438
      %v1440 = vsel %vm1267, %v1439, %v1435
      %v1441 = vlaneseq
      %v1442 = vshrl.u32 %v1441, 7
      %v1443 = vsub.s32 %v1269, %v1442
      %v1444 = vrot.slane %v1120, %v1443
      %v1445 = vsel %vm1274, %v1444, %v1440
      %v1446 = vlaneseq
      %v1447 = vshrl.u32 %v1446, 7
      %v1448 = vsub.s32 %v1276, %v1447
      %v1449 = vrot.slane %v1121, %v1448
      %v1450 = vsel %vm1281, %v1449, %v1445
      %v1451 = vlaneseq
      %v1452 = vshrl.u32 %v1451, 7
      %v1453 = vsub.s32 %v1283, %v1452
      %v1454 = vrot.slane %v1122, %v1453
      %v1455 = vsel %vm1288, %v1454, %v1450
      %v1456 = vlaneseq
      %v1457 = vshrl.u32 %v1456, 7
      %v1458 = vsub.s32 %v1290, %v1457
      %v1459 = vrot.slane %v1123, %v1458
      %v1460 = vsel %vm1295, %v1459, %v1455
      %v1461 = vlaneseq
      %v1462 = vshrl.u32 %v1461, 7
      %v1463 = vsub.s32 %v1297, %v1462
      %v1464 = vrot.slane %v1124, %v1463
      %v1465 = vsel %vm1302, %v1464, %v1460
      %v1466 = vlaneseq
      %v1467 = vshrl.u32 %v1466, 7
      %v1468 = vsub.s32 %v1304, %v1467
      %v1469 = vrot.slane %v1125, %v1468
      %v1470 = vsel %vm1309, %v1469, %v1465
      %v1471 = vlaneseq
      %v1472 = vshrl.u32 %v1471, 7
      %v1473 = vsub.s32 %v1311, %v1472
      %v1474 = vrot.slane %v1126, %v1473
      %v1475 = vsel %vm1316, %v1474, %v1470
      %v1476 = vlaneseq
      %v1477 = vshrl.u32 %v1476, 7
      %v1478 = vsub.s32 %v475, %v1477
      %v1479 = vrot.slane %v1127, %v1478
      %v1480 = vlaneseq
      %v1481 = vshrl.u32 %v1480, 7
      %v1482 = vsub.s32 %v1213, %v1481
      %v1483 = vrot.slane %v1128, %v1482
      %v1484 = vsel %vm1218, %v1483, %v1479
      %v1485 = vlaneseq
      %v1486 = vshrl.u32 %v1485, 7
      %v1487 = vsub.s32 %v1220, %v1486
      %v1488 = vrot.slane %v1129, %v1487
      %v1489 = vsel %vm1225, %v1488, %v1484
      %v1490 = vlaneseq
      %v1491 = vshrl.u32 %v1490, 7
      %v1492 = vsub.s32 %v1227, %v1491
      %v1493 = vrot.slane %v1130, %v1492
      %v1494 = vsel %vm1232, %v1493, %v1489
      %v1495 = vlaneseq
      %v1496 = vshrl.u32 %v1495, 7
      %v1497 = vsub.s32 %v1234, %v1496
      %v1498 = vrot.slane %v1131, %v1497
      %v1499 = vsel %vm1239, %v1498, %v1494
      %v1500 = vlaneseq
      %v1501 = vshrl.u32 %v1500, 7
      %v1502 = vsub.s32 %v1241, %v1501
      %v1503 = vrot.slane %v1132, %v1502
      %v1504 = vsel %vm1246, %v1503, %v1499
      %v1505 = vlaneseq
      %v1506 = vshrl.u32 %v1505, 7
      %v1507 = vsub.s32 %v1248, %v1506
      %v1508 = vrot.slane %v1133, %v1507
      %v1509 = vsel %vm1253, %v1508, %v1504
      %v1510 = vlaneseq
      %v1511 = vshrl.u32 %v1510, 7
      %v1512 = vsub.s32 %v1255, %v1511
      %v1513 = vrot.slane %v1134, %v1512
      %v1514 = vsel %vm1260, %v1513, %v1509
      %v1515 = vlaneseq
      %v1516 = vshrl.u32 %v1515, 7
      %v1517 = vsub.s32 %v1262, %v1516
      %v1518 = vrot.slane %v1135, %v1517
      %v1519 = vsel %vm1267, %v1518, %v1514
      %v1520 = vlaneseq
      %v1521 = vshrl.u32 %v1520, 7
      %v1522 = vsub.s32 %v1269, %v1521
      %v1523 = vrot.slane %v1136, %v1522
      %v1524 = vsel %vm1274, %v1523, %v1519
      %v1525 = vlaneseq
      %v1526 = vshrl.u32 %v1525, 7
      %v1527 = vsub.s32 %v1276, %v1526
      %v1528 = vrot.slane %v1137, %v1527
      %v1529 = vsel %vm1281, %v1528, %v1524
      %v1530 = vlaneseq
      %v1531 = vshrl.u32 %v1530, 7
      %v1532 = vsub.s32 %v1283, %v1531
      %v1533 = vrot.slane %v1138, %v1532
      %v1534 = vsel %vm1288, %v1533, %v1529
      %v1535 = vlaneseq
      %v1536 = vshrl.u32 %v1535, 7
      %v1537 = vsub.s32 %v1290, %v1536
      %v1538 = vrot.slane %v1139, %v1537
      %v1539 = vsel %vm1295, %v1538, %v1534
      %v1540 = vlaneseq
      %v1541 = vshrl.u32 %v1540, 7
      %v1542 = vsub.s32 %v1297, %v1541
      %v1543 = vrot.slane %v1140, %v1542
      %v1544 = vsel %vm1302, %v1543, %v1539
      %v1545 = vlaneseq
      %v1546 = vshrl.u32 %v1545, 7
      %v1547 = vsub.s32 %v1304, %v1546
      %v1548 = vrot.slane %v1141, %v1547
      %v1549 = vsel %vm1309, %v1548, %v1544
      %v1550 = vlaneseq
      %v1551 = vshrl.u32 %v1550, 7
      %v1552 = vsub.s32 %v1311, %v1551
      %v1553 = vrot.slane %v1142, %v1552
      %v1554 = vsel %vm1316, %v1553, %v1549
      %v1555 = vsel %vm310, %v1396, %v1317
      %v1556 = vsel %vm312, %v1475, %v1555
      %v1557 = vsel %vm314, %v1554, %v1556
      %v1559 = vsel %vm1144, %v1557, -1e+30
      %vm1560 = vcmask 1043456
      %v1561 = vsel %vm1560, %v1559, -inf
      %1562 = vmax.xlane.f32.xlu0 %v1561
      %v1563 = vpop.xlane.xlu0 %1562
      %v1564 = vsub.f32 %v1559, %v1563
      %v1565 = vmul.f32 %v1564, 1.442695
      %v1566 = vpow.pop %v1565
      %v1567 = vsel %vm1560, %v1566, 0.0
      %1568 = vadd.xlane.f32.xlu0 %v1567
      %v1569 = vpop.xlane.xlu0 %1568
      %v1570 = vrcp.pop %v1569
      %v1571 = vmul.f32 %v1566, %v1570
      %v1572 = vld [vmem:[%s0] sm:$0xff]
      %v1573 = vld [vmem:[%s0 + $0x8] sm:$0xff]
      %v1574 = vld [vmem:[%s0 + $0x10] sm:$0xff]
      %v1575 = vld [vmem:[%s0 + $0x18] sm:$0xff]
      %v1576 = vld [vmem:[%s0 + $0x20] sm:$0xff]
      %v1577 = vld [vmem:[%s0 + $0x28] sm:$0xff]
      %v1578 = vld [vmem:[%s0 + $0x30] sm:$0xff]
      %v1579 = vld [vmem:[%s0 + $0x38] sm:$0xff]
      %v1580 = vld [vmem:[%s0 + $0x40] sm:$0xff]
      %v1581 = vld [vmem:[%s0 + $0x48] sm:$0xff]
      %v1582 = vld [vmem:[%s0 + $0x50] sm:$0xff]
      %v1583 = vld [vmem:[%s0 + $0x58] sm:$0xff]
      %v1584 = vld [vmem:[%s0 + $0x60] sm:$0xff]
      %v1585 = vld [vmem:[%s0 + $0x68] sm:$0xff]
      %v1586 = vld [vmem:[%s0 + $0x70] sm:$0xff]
      %v1587 = vld [vmem:[%s0 + $0x78] sm:$0xff]
      %v1588 = vld [vmem:[%s0 + $0x80] sm:$0xff]
      %v1589 = vld [vmem:[%s0 + $0x88] sm:$0xff]
      %v1590 = vld [vmem:[%s0 + $0x90] sm:$0xff]
      %v1591 = vld [vmem:[%s0 + $0x98] sm:$0xff]
      %v1592 = vld [vmem:[%s0 + $0xa0] sm:$0xff]
      %v1593 = vld [vmem:[%s0 + $0xa8] sm:$0xff]
      %v1594 = vld [vmem:[%s0 + $0xb0] sm:$0xff]
      %v1595 = vld [vmem:[%s0 + $0xb8] sm:$0xff]
      %v1596 = vld [vmem:[%s0 + $0xc0] sm:$0xff]
      %v1597 = vld [vmem:[%s0 + $0xc8] sm:$0xff]
      %v1598 = vld [vmem:[%s0 + $0xd0] sm:$0xff]
      %v1599 = vld [vmem:[%s0 + $0xd8] sm:$0xff]
      %v1600 = vld [vmem:[%s0 + $0xe0] sm:$0xff]
      %v1601 = vld [vmem:[%s0 + $0xe8] sm:$0xff]
      %v1602 = vld [vmem:[%s0 + $0xf0] sm:$0xff]
      %v1603 = vld [vmem:[%s0 + $0xf8] sm:$0xff]
      %v1604 = vld [vmem:[%s0 + $0x100] sm:$0xff]
      %v1605 = vld [vmem:[%s0 + $0x108] sm:$0xff]
      %v1606 = vld [vmem:[%s0 + $0x110] sm:$0xff]
      %v1607 = vld [vmem:[%s0 + $0x118] sm:$0xff]
      %v1608 = vld [vmem:[%s0 + $0x120] sm:$0xff]
      %v1609 = vld [vmem:[%s0 + $0x128] sm:$0xff]
      %v1610 = vld [vmem:[%s0 + $0x130] sm:$0xff]
      %v1611 = vld [vmem:[%s0 + $0x138] sm:$0xff]
      %v1612 = vld [vmem:[%s0 + $0x140] sm:$0xff]
      %v1613 = vld [vmem:[%s0 + $0x148] sm:$0xff]
      %v1614 = vld [vmem:[%s0 + $0x150] sm:$0xff]
      %v1615 = vld [vmem:[%s0 + $0x158] sm:$0xff]
      %v1616 = vld [vmem:[%s0 + $0x160] sm:$0xff]
      %v1617 = vld [vmem:[%s0 + $0x168] sm:$0xff]
      %v1618 = vld [vmem:[%s0 + $0x170] sm:$0xff]
      %v1619 = vld [vmem:[%s0 + $0x178] sm:$0xff]
      %v1620 = vld [vmem:[%s0 + $0x180] sm:$0xff]
      %v1621 = vld [vmem:[%s0 + $0x188] sm:$0xff]
      %v1622 = vld [vmem:[%s0 + $0x190] sm:$0xff]
      %v1623 = vld [vmem:[%s0 + $0x198] sm:$0xff]
      %v1624 = vld [vmem:[%s0 + $0x1a0] sm:$0xff]
      %v1625 = vld [vmem:[%s0 + $0x1a8] sm:$0xff]
      %v1626 = vld [vmem:[%s0 + $0x1b0] sm:$0xff]
      %v1627 = vld [vmem:[%s0 + $0x1b8] sm:$0xff]
      %v1628 = vld [vmem:[%s0 + $0x1c0] sm:$0xff]
      %v1629 = vld [vmem:[%s0 + $0x1c8] sm:$0xff]
      %v1630 = vld [vmem:[%s0 + $0x1d0] sm:$0xff]
      %v1631 = vld [vmem:[%s0 + $0x1d8] sm:$0xff]
      %v1632 = vld [vmem:[%s0 + $0x1e0] sm:$0xff]
      %v1633 = vld [vmem:[%s0 + $0x1e8] sm:$0xff]
      %v1634 = vld [vmem:[%s0 + $0x1f0] sm:$0xff]
      %v1635 = vld [vmem:[%s0 + $0x1f8] sm:$0xff]
      %v1636 = vlaneseq
      %v1637 = vshrl.u32 %v1636, 7
      %v1638 = vsub.s32 0, %v1637
      %v1639 = vrot.slane %v1571, %v1638
      %1641 = vbcast.lane.b32.xlu0 %v1639, 256
      %v1642 = vpop.permute.xlu0 %1641
      %s1644 = sor.u32 256, 8
      %1645 = vbcast.lane.b32.xlu0 %v1639, %s1644
      %v1646 = vpop.permute.xlu0 %1645
      %s1648 = sor.u32 256, 16
      %1649 = vbcast.lane.b32.xlu0 %v1639, %s1648
      %v1650 = vpop.permute.xlu0 %1649
      %s1652 = sor.u32 256, 24
      %1653 = vbcast.lane.b32.xlu0 %v1639, %s1652
      %v1654 = vpop.permute.xlu0 %1653
      %s1656 = sor.u32 256, 32
      %1657 = vbcast.lane.b32.xlu0 %v1639, %s1656
      %v1658 = vpop.permute.xlu0 %1657
      %s1660 = sor.u32 256, 40
      %1661 = vbcast.lane.b32.xlu0 %v1639, %s1660
      %v1662 = vpop.permute.xlu0 %1661
      %s1664 = sor.u32 256, 48
      %1665 = vbcast.lane.b32.xlu0 %v1639, %s1664
      %v1666 = vpop.permute.xlu0 %1665
      %s1668 = sor.u32 256, 56
      %1669 = vbcast.lane.b32.xlu0 %v1639, %s1668
      %v1670 = vpop.permute.xlu0 %1669
      %s1672 = sor.u32 256, 64
      %1673 = vbcast.lane.b32.xlu0 %v1639, %s1672
      %v1674 = vpop.permute.xlu0 %1673
      %s1676 = sor.u32 256, 72
      %1677 = vbcast.lane.b32.xlu0 %v1639, %s1676
      %v1678 = vpop.permute.xlu0 %1677
      %s1680 = sor.u32 256, 80
      %1681 = vbcast.lane.b32.xlu0 %v1639, %s1680
      %v1682 = vpop.permute.xlu0 %1681
      %s1684 = sor.u32 256, 88
      %1685 = vbcast.lane.b32.xlu0 %v1639, %s1684
      %v1686 = vpop.permute.xlu0 %1685
      %s1688 = sor.u32 256, 96
      %1689 = vbcast.lane.b32.xlu0 %v1639, %s1688
      %v1690 = vpop.permute.xlu0 %1689
      %s1692 = sor.u32 256, 104
      %1693 = vbcast.lane.b32.xlu0 %v1639, %s1692
      %v1694 = vpop.permute.xlu0 %1693
      %s1696 = sor.u32 256, 112
      %1697 = vbcast.lane.b32.xlu0 %v1639, %s1696
      %v1698 = vpop.permute.xlu0 %1697
      %s1700 = sor.u32 256, 120
      %1701 = vbcast.lane.b32.xlu0 %v1639, %s1700
      %v1702 = vpop.permute.xlu0 %1701
      %v1703 = vlaneseq
      %v1704 = vshrl.u32 %v1703, 7
      %v1705 = vsub.s32 1, %v1704
      %v1706 = vrot.slane %v1571, %v1705
      %1708 = vbcast.lane.b32.xlu0 %v1706, 256
      %v1709 = vpop.permute.xlu0 %1708
      %s1711 = sor.u32 256, 8
      %1712 = vbcast.lane.b32.xlu0 %v1706, %s1711
      %v1713 = vpop.permute.xlu0 %1712
      %s1715 = sor.u32 256, 16
      %1716 = vbcast.lane.b32.xlu0 %v1706, %s1715
      %v1717 = vpop.permute.xlu0 %1716
      %s1719 = sor.u32 256, 24
      %1720 = vbcast.lane.b32.xlu0 %v1706, %s1719
      %v1721 = vpop.permute.xlu0 %1720
      %s1723 = sor.u32 256, 32
      %1724 = vbcast.lane.b32.xlu0 %v1706, %s1723
      %v1725 = vpop.permute.xlu0 %1724
      %s1727 = sor.u32 256, 40
      %1728 = vbcast.lane.b32.xlu0 %v1706, %s1727
      %v1729 = vpop.permute.xlu0 %1728
      %s1731 = sor.u32 256, 48
      %1732 = vbcast.lane.b32.xlu0 %v1706, %s1731
      %v1733 = vpop.permute.xlu0 %1732
      %s1735 = sor.u32 256, 56
      %1736 = vbcast.lane.b32.xlu0 %v1706, %s1735
      %v1737 = vpop.permute.xlu0 %1736
      %s1739 = sor.u32 256, 64
      %1740 = vbcast.lane.b32.xlu0 %v1706, %s1739
      %v1741 = vpop.permute.xlu0 %1740
      %s1743 = sor.u32 256, 72
      %1744 = vbcast.lane.b32.xlu0 %v1706, %s1743
      %v1745 = vpop.permute.xlu0 %1744
      %s1747 = sor.u32 256, 80
      %1748 = vbcast.lane.b32.xlu0 %v1706, %s1747
      %v1749 = vpop.permute.xlu0 %1748
      %s1751 = sor.u32 256, 88
      %1752 = vbcast.lane.b32.xlu0 %v1706, %s1751
      %v1753 = vpop.permute.xlu0 %1752
      %s1755 = sor.u32 256, 96
      %1756 = vbcast.lane.b32.xlu0 %v1706, %s1755
      %v1757 = vpop.permute.xlu0 %1756
      %s1759 = sor.u32 256, 104
      %1760 = vbcast.lane.b32.xlu0 %v1706, %s1759
      %v1761 = vpop.permute.xlu0 %1760
      %s1763 = sor.u32 256, 112
      %1764 = vbcast.lane.b32.xlu0 %v1706, %s1763
      %v1765 = vpop.permute.xlu0 %1764
      %s1767 = sor.u32 256, 120
      %1768 = vbcast.lane.b32.xlu0 %v1706, %s1767
      %v1769 = vpop.permute.xlu0 %1768
      %v1770 = vlaneseq
      %v1771 = vshrl.u32 %v1770, 7
      %v1772 = vsub.s32 2, %v1771
      %v1773 = vrot.slane %v1571, %v1772
      %1775 = vbcast.lane.b32.xlu0 %v1773, 256
      %v1776 = vpop.permute.xlu0 %1775
      %s1778 = sor.u32 256, 8
      %1779 = vbcast.lane.b32.xlu0 %v1773, %s1778
      %v1780 = vpop.permute.xlu0 %1779
      %s1782 = sor.u32 256, 16
      %1783 = vbcast.lane.b32.xlu0 %v1773, %s1782
      %v1784 = vpop.permute.xlu0 %1783
      %s1786 = sor.u32 256, 24
      %1787 = vbcast.lane.b32.xlu0 %v1773, %s1786
      %v1788 = vpop.permute.xlu0 %1787
      %s1790 = sor.u32 256, 32
      %1791 = vbcast.lane.b32.xlu0 %v1773, %s1790
      %v1792 = vpop.permute.xlu0 %1791
      %s1794 = sor.u32 256, 40
      %1795 = vbcast.lane.b32.xlu0 %v1773, %s1794
      %v1796 = vpop.permute.xlu0 %1795
      %s1798 = sor.u32 256, 48
      %1799 = vbcast.lane.b32.xlu0 %v1773, %s1798
      %v1800 = vpop.permute.xlu0 %1799
      %s1802 = sor.u32 256, 56
      %1803 = vbcast.lane.b32.xlu0 %v1773, %s1802
      %v1804 = vpop.permute.xlu0 %1803
      %s1806 = sor.u32 256, 64
      %1807 = vbcast.lane.b32.xlu0 %v1773, %s1806
      %v1808 = vpop.permute.xlu0 %1807
      %s1810 = sor.u32 256, 72
      %1811 = vbcast.lane.b32.xlu0 %v1773, %s1810
      %v1812 = vpop.permute.xlu0 %1811
      %s1814 = sor.u32 256, 80
      %1815 = vbcast.lane.b32.xlu0 %v1773, %s1814
      %v1816 = vpop.permute.xlu0 %1815
      %s1818 = sor.u32 256, 88
      %1819 = vbcast.lane.b32.xlu0 %v1773, %s1818
      %v1820 = vpop.permute.xlu0 %1819
      %s1822 = sor.u32 256, 96
      %1823 = vbcast.lane.b32.xlu0 %v1773, %s1822
      %v1824 = vpop.permute.xlu0 %1823
      %s1826 = sor.u32 256, 104
      %1827 = vbcast.lane.b32.xlu0 %v1773, %s1826
      %v1828 = vpop.permute.xlu0 %1827
      %s1830 = sor.u32 256, 112
      %1831 = vbcast.lane.b32.xlu0 %v1773, %s1830
      %v1832 = vpop.permute.xlu0 %1831
      %s1834 = sor.u32 256, 120
      %1835 = vbcast.lane.b32.xlu0 %v1773, %s1834
      %v1836 = vpop.permute.xlu0 %1835
      %v1837 = vlaneseq
      %v1838 = vshrl.u32 %v1837, 7
      %v1839 = vsub.s32 3, %v1838
      %v1840 = vrot.slane %v1571, %v1839
      %1842 = vbcast.lane.b32.xlu0 %v1840, 256
      %v1843 = vpop.permute.xlu0 %1842
      %s1845 = sor.u32 256, 8
      %1846 = vbcast.lane.b32.xlu0 %v1840, %s1845
      %v1847 = vpop.permute.xlu0 %1846
      %s1849 = sor.u32 256, 16
      %1850 = vbcast.lane.b32.xlu0 %v1840, %s1849
      %v1851 = vpop.permute.xlu0 %1850
      %s1853 = sor.u32 256, 24
      %1854 = vbcast.lane.b32.xlu0 %v1840, %s1853
      %v1855 = vpop.permute.xlu0 %1854
      %s1857 = sor.u32 256, 32
      %1858 = vbcast.lane.b32.xlu0 %v1840, %s1857
      %v1859 = vpop.permute.xlu0 %1858
      %s1861 = sor.u32 256, 40
      %1862 = vbcast.lane.b32.xlu0 %v1840, %s1861
      %v1863 = vpop.permute.xlu0 %1862
      %s1865 = sor.u32 256, 48
      %1866 = vbcast.lane.b32.xlu0 %v1840, %s1865
      %v1867 = vpop.permute.xlu0 %1866
      %s1869 = sor.u32 256, 56
      %1870 = vbcast.lane.b32.xlu0 %v1840, %s1869
      %v1871 = vpop.permute.xlu0 %1870
      %s1873 = sor.u32 256, 64
      %1874 = vbcast.lane.b32.xlu0 %v1840, %s1873
      %v1875 = vpop.permute.xlu0 %1874
      %s1877 = sor.u32 256, 72
      %1878 = vbcast.lane.b32.xlu0 %v1840, %s1877
      %v1879 = vpop.permute.xlu0 %1878
      %s1881 = sor.u32 256, 80
      %1882 = vbcast.lane.b32.xlu0 %v1840, %s1881
      %v1883 = vpop.permute.xlu0 %1882
      %s1885 = sor.u32 256, 88
      %1886 = vbcast.lane.b32.xlu0 %v1840, %s1885
      %v1887 = vpop.permute.xlu0 %1886
      %s1889 = sor.u32 256, 96
      %1890 = vbcast.lane.b32.xlu0 %v1840, %s1889
      %v1891 = vpop.permute.xlu0 %1890
      %s1893 = sor.u32 256, 104
      %1894 = vbcast.lane.b32.xlu0 %v1840, %s1893
      %v1895 = vpop.permute.xlu0 %1894
      %s1897 = sor.u32 256, 112
      %1898 = vbcast.lane.b32.xlu0 %v1840, %s1897
      %v1899 = vpop.permute.xlu0 %1898
      %s1901 = sor.u32 256, 120
      %1902 = vbcast.lane.b32.xlu0 %v1840, %s1901
      %v1903 = vpop.permute.xlu0 %1902
      %v1904 = vmul.f32 %v1572, %v1642
      %v1905 = vmul.f32 %v1573, %v1646
      %v1906 = vmul.f32 %v1574, %v1650
      %v1907 = vmul.f32 %v1575, %v1654
      %v1908 = vmul.f32 %v1576, %v1658
      %v1909 = vmul.f32 %v1577, %v1662
      %v1910 = vmul.f32 %v1578, %v1666
      %v1911 = vmul.f32 %v1579, %v1670
      %v1912 = vmul.f32 %v1580, %v1674
      %v1913 = vmul.f32 %v1581, %v1678
      %v1914 = vmul.f32 %v1582, %v1682
      %v1915 = vmul.f32 %v1583, %v1686
      %v1916 = vmul.f32 %v1584, %v1690
      %v1917 = vmul.f32 %v1585, %v1694
      %v1918 = vmul.f32 %v1586, %v1698
      %v1919 = vmul.f32 %v1587, %v1702
      %v1920 = vmul.f32 %v1588, %v1709
      %v1921 = vmul.f32 %v1589, %v1713
      %v1922 = vmul.f32 %v1590, %v1717
      %v1923 = vmul.f32 %v1591, %v1721
      %v1924 = vmul.f32 %v1592, %v1725
      %v1925 = vmul.f32 %v1593, %v1729
      %v1926 = vmul.f32 %v1594, %v1733
      %v1927 = vmul.f32 %v1595, %v1737
      %v1928 = vmul.f32 %v1596, %v1741
      %v1929 = vmul.f32 %v1597, %v1745
      %v1930 = vmul.f32 %v1598, %v1749
      %v1931 = vmul.f32 %v1599, %v1753
      %v1932 = vmul.f32 %v1600, %v1757
      %v1933 = vmul.f32 %v1601, %v1761
      %v1934 = vmul.f32 %v1602, %v1765
      %v1935 = vmul.f32 %v1603, %v1769
      %v1936 = vmul.f32 %v1604, %v1776
      %v1937 = vmul.f32 %v1605, %v1780
      %v1938 = vmul.f32 %v1606, %v1784
      %v1939 = vmul.f32 %v1607, %v1788
      %v1940 = vmul.f32 %v1608, %v1792
      %v1941 = vmul.f32 %v1609, %v1796
      %v1942 = vmul.f32 %v1610, %v1800
      %v1943 = vmul.f32 %v1611, %v1804
      %v1944 = vmul.f32 %v1612, %v1808
      %v1945 = vmul.f32 %v1613, %v1812
      %v1946 = vmul.f32 %v1614, %v1816
      %v1947 = vmul.f32 %v1615, %v1820
      %v1948 = vmul.f32 %v1616, %v1824
      %v1949 = vmul.f32 %v1617, %v1828
      %v1950 = vmul.f32 %v1618, %v1832
      %v1951 = vmul.f32 %v1619, %v1836
      %v1952 = vmul.f32 %v1620, %v1843
      %v1953 = vmul.f32 %v1621, %v1847
      %v1954 = vmul.f32 %v1622, %v1851
      %v1955 = vmul.f32 %v1623, %v1855
      %v1956 = vmul.f32 %v1624, %v1859
      %v1957 = vmul.f32 %v1625, %v1863
      %v1958 = vmul.f32 %v1626, %v1867
      %v1959 = vmul.f32 %v1627, %v1871
      %v1960 = vmul.f32 %v1628, %v1875
      %v1961 = vmul.f32 %v1629, %v1879
      %v1962 = vmul.f32 %v1630, %v1883
      %v1963 = vmul.f32 %v1631, %v1887
      %v1964 = vmul.f32 %v1632, %v1891
      %v1965 = vmul.f32 %v1633, %v1895
      %v1966 = vmul.f32 %v1634, %v1899
      %v1967 = vmul.f32 %v1635, %v1903
      %v1968 = vsel %vm142, %v1904, 0.0
      %v1969 = vsel %vm142, %v1905, 0.0
      %v1970 = vadd.f32 %v1968, %v1969
      %v1971 = vsel %vm142, %v1906, 0.0
      %v1972 = vadd.f32 %v1970, %v1971
      %v1973 = vsel %vm142, %v1907, 0.0
      %v1974 = vadd.f32 %v1972, %v1973
      %v1975 = vsel %vm142, %v1908, 0.0
      %v1976 = vadd.f32 %v1974, %v1975
      %v1977 = vsel %vm142, %v1909, 0.0
      %v1978 = vadd.f32 %v1976, %v1977
      %v1979 = vsel %vm142, %v1910, 0.0
      %v1980 = vadd.f32 %v1978, %v1979
      %v1981 = vsel %vm142, %v1911, 0.0
      %v1982 = vadd.f32 %v1980, %v1981
      %v1983 = vsel %vm142, %v1912, 0.0
      %v1984 = vadd.f32 %v1982, %v1983
      %v1985 = vsel %vm142, %v1913, 0.0
      %v1986 = vadd.f32 %v1984, %v1985
      %v1987 = vsel %vm142, %v1914, 0.0
      %v1988 = vadd.f32 %v1986, %v1987
      %v1989 = vsel %vm142, %v1915, 0.0
      %v1990 = vadd.f32 %v1988, %v1989
      %v1991 = vsel %vm142, %v1916, 0.0
      %v1992 = vadd.f32 %v1990, %v1991
      %v1993 = vsel %vm142, %v1917, 0.0
      %v1994 = vadd.f32 %v1992, %v1993
      %v1995 = vsel %vm142, %v1918, 0.0
      %v1996 = vadd.f32 %v1994, %v1995
      %v1997 = vsel %vm142, %v1919, 0.0
      %v1998 = vadd.f32 %v1996, %v1997
      %v1999 = vrot.slane %v1998, 4
      %v2000 = vadd.f32 %v1998, %v1999
      %v2001 = vrot.slane %v2000, 2
      %v2002 = vadd.f32 %v2000, %v2001
      %v2003 = vrot.slane %v2002, 1
      %v2004 = vadd.f32 %v2002, %v2003
      %v2005 = vsel %vm142, %v1920, 0.0
      %v2006 = vsel %vm142, %v1921, 0.0
      %v2007 = vadd.f32 %v2005, %v2006
      %v2008 = vsel %vm142, %v1922, 0.0
      %v2009 = vadd.f32 %v2007, %v2008
      %v2010 = vsel %vm142, %v1923, 0.0
      %v2011 = vadd.f32 %v2009, %v2010
      %v2012 = vsel %vm142, %v1924, 0.0
      %v2013 = vadd.f32 %v2011, %v2012
      %v2014 = vsel %vm142, %v1925, 0.0
      %v2015 = vadd.f32 %v2013, %v2014
      %v2016 = vsel %vm142, %v1926, 0.0
      %v2017 = vadd.f32 %v2015, %v2016
      %v2018 = vsel %vm142, %v1927, 0.0
      %v2019 = vadd.f32 %v2017, %v2018
      %v2020 = vsel %vm142, %v1928, 0.0
      %v2021 = vadd.f32 %v2019, %v2020
      %v2022 = vsel %vm142, %v1929, 0.0
      %v2023 = vadd.f32 %v2021, %v2022
      %v2024 = vsel %vm142, %v1930, 0.0
      %v2025 = vadd.f32 %v2023, %v2024
      %v2026 = vsel %vm142, %v1931, 0.0
      %v2027 = vadd.f32 %v2025, %v2026
      %v2028 = vsel %vm142, %v1932, 0.0
      %v2029 = vadd.f32 %v2027, %v2028
      %v2030 = vsel %vm142, %v1933, 0.0
      %v2031 = vadd.f32 %v2029, %v2030
      %v2032 = vsel %vm142, %v1934, 0.0
      %v2033 = vadd.f32 %v2031, %v2032
      %v2034 = vsel %vm142, %v1935, 0.0
      %v2035 = vadd.f32 %v2033, %v2034
      %v2036 = vrot.slane %v2035, 4
      %v2037 = vadd.f32 %v2035, %v2036
      %v2038 = vrot.slane %v2037, 2
      %v2039 = vadd.f32 %v2037, %v2038
      %v2040 = vrot.slane %v2039, 1
      %v2041 = vadd.f32 %v2039, %v2040
      %v2042 = vsel %vm142, %v1936, 0.0
      %v2043 = vsel %vm142, %v1937, 0.0
      %v2044 = vadd.f32 %v2042, %v2043
      %v2045 = vsel %vm142, %v1938, 0.0
      %v2046 = vadd.f32 %v2044, %v2045
      %v2047 = vsel %vm142, %v1939, 0.0
      %v2048 = vadd.f32 %v2046, %v2047
      %v2049 = vsel %vm142, %v1940, 0.0
      %v2050 = vadd.f32 %v2048, %v2049
      %v2051 = vsel %vm142, %v1941, 0.0
      %v2052 = vadd.f32 %v2050, %v2051
      %v2053 = vsel %vm142, %v1942, 0.0
      %v2054 = vadd.f32 %v2052, %v2053
      %v2055 = vsel %vm142, %v1943, 0.0
      %v2056 = vadd.f32 %v2054, %v2055
      %v2057 = vsel %vm142, %v1944, 0.0
      %v2058 = vadd.f32 %v2056, %v2057
      %v2059 = vsel %vm142, %v1945, 0.0
      %v2060 = vadd.f32 %v2058, %v2059
      %v2061 = vsel %vm142, %v1946, 0.0
      %v2062 = vadd.f32 %v2060, %v2061
      %v2063 = vsel %vm142, %v1947, 0.0
      %v2064 = vadd.f32 %v2062, %v2063
      %v2065 = vsel %vm142, %v1948, 0.0
      %v2066 = vadd.f32 %v2064, %v2065
      %v2067 = vsel %vm142, %v1949, 0.0
      %v2068 = vadd.f32 %v2066, %v2067
      %v2069 = vsel %vm142, %v1950, 0.0
      %v2070 = vadd.f32 %v2068, %v2069
      %v2071 = vsel %vm142, %v1951, 0.0
      %v2072 = vadd.f32 %v2070, %v2071
      %v2073 = vrot.slane %v2072, 4
      %v2074 = vadd.f32 %v2072, %v2073
      %v2075 = vrot.slane %v2074, 2
      %v2076 = vadd.f32 %v2074, %v2075
      %v2077 = vrot.slane %v2076, 1
      %v2078 = vadd.f32 %v2076, %v2077
      %v2079 = vsel %vm142, %v1952, 0.0
      %v2080 = vsel %vm142, %v1953, 0.0
      %v2081 = vadd.f32 %v2079, %v2080
      %v2082 = vsel %vm142, %v1954, 0.0
      %v2083 = vadd.f32 %v2081, %v2082
      %v2084 = vsel %vm142, %v1955, 0.0
      %v2085 = vadd.f32 %v2083, %v2084
      %v2086 = vsel %vm142, %v1956, 0.0
      %v2087 = vadd.f32 %v2085, %v2086
      %v2088 = vsel %vm142, %v1957, 0.0
      %v2089 = vadd.f32 %v2087, %v2088
      %v2090 = vsel %vm142, %v1958, 0.0
      %v2091 = vadd.f32 %v2089, %v2090
      %v2092 = vsel %vm142, %v1959, 0.0
      %v2093 = vadd.f32 %v2091, %v2092
      %v2094 = vsel %vm142, %v1960, 0.0
      %v2095 = vadd.f32 %v2093, %v2094
      %v2096 = vsel %vm142, %v1961, 0.0
      %v2097 = vadd.f32 %v2095, %v2096
      %v2098 = vsel %vm142, %v1962, 0.0
      %v2099 = vadd.f32 %v2097, %v2098
      %v2100 = vsel %vm142, %v1963, 0.0
      %v2101 = vadd.f32 %v2099, %v2100
      %v2102 = vsel %vm142, %v1964, 0.0
      %v2103 = vadd.f32 %v2101, %v2102
      %v2104 = vsel %vm142, %v1965, 0.0
      %v2105 = vadd.f32 %v2103, %v2104
      %v2106 = vsel %vm142, %v1966, 0.0
      %v2107 = vadd.f32 %v2105, %v2106
      %v2108 = vsel %vm142, %v1967, 0.0
      %v2109 = vadd.f32 %v2107, %v2108
      %v2110 = vrot.slane %v2109, 4
      %v2111 = vadd.f32 %v2109, %v2110
      %v2112 = vrot.slane %v2111, 2
      %v2113 = vadd.f32 %v2111, %v2112
      %v2114 = vrot.slane %v2113, 1
      %v2115 = vadd.f32 %v2113, %v2114
      %v2116 = vld [vmem:[%s12] sm:$0xff]
      %v2117 = vld [vmem:[%s12 + $0x8] sm:$0xff]
      %v2118 = vld [vmem:[%s12 + $0x10] sm:$0xff]
      %v2119 = vld [vmem:[%s12 + $0x18] sm:$0xff]
      %v2120 = vld [vmem:[%s13] sm:$0x1]
      %v2122 = vlaneseq
      %v2123 = vshrl.u32 %v2122, 7
      %v2124 = vsub.s32 0, %v2123
      %v2125 = vrot.slane %v2120, %v2124
      %2127 = vmatprep.subr.mxu0 0.0
      %2128 = vmatpush1.msra.mxu0 0.0
      %2129 = vmatprep.subr.mxu0 0.0
      %2130 = vmatpush1.msra.mxu0 0.0
      %2131 = vmatprep.subr.mxu0 0.0
      %2132 = vmatpush1.msra.mxu0 0.0
      %2133 = vmatprep.subr.mxu0 0.0
      %2134 = vmatpush1.msra.mxu0 0.0
      %2135 = vmatprep.subr.mxu0 0.0
      %2136 = vmatpush1.msra.mxu0 0.0
      %2137 = vmatprep.subr.mxu0 0.0
      %2138 = vmatpush1.msra.mxu0 0.0
      %2139 = vmatprep.subr.mxu0 0.0
      %2140 = vmatpush1.msra.mxu0 0.0
      %2141 = vmatprep.subr.mxu0 0.0
      %2142 = vmatpush1.msra.mxu0 0.0
      %2143 = vmatprep.subr.mxu0 0.0
      %2144 = vmatpush1.msra.mxu0 0.0
      %2145 = vmatprep.subr.mxu0 0.0
      %2146 = vmatpush1.msra.mxu0 0.0
      %2147 = vmatprep.subr.mxu0 0.0
      %2148 = vmatpush1.msra.mxu0 0.0
      %2149 = vmatprep.subr.mxu0 0.0
      %2150 = vmatpush1.msra.mxu0 0.0
      %2151 = vmatprep.subr.mxu0 0.0
      %2152 = vmatpush1.msra.mxu0 %v2119
      %2153 = vmatprep.subr.mxu0 0.0
      %2154 = vmatpush1.msra.mxu0 %v2118
      %2155 = vmatprep.subr.mxu0 0.0
      %2156 = vmatpush1.msra.mxu0 %v2117
      %2157 = vmatprep.subr.mxu0 0.0
      %2158 = vmatpush1.msra.mxu0 %v2116
      %2159 = vmatprep.subr.mxu0 0.0
      %2160 = vmatpush2.msra.mxu0 0.0
      %2161 = vmatprep.subr.mxu0 0.0
      %2162 = vmatpush2.msra.mxu0 0.0
      %2163 = vmatprep.subr.mxu0 0.0
      %2164 = vmatpush2.msra.mxu0 0.0
      %2165 = vmatprep.subr.mxu0 0.0
      %2166 = vmatpush2.msra.mxu0 0.0
      %2167 = vmatprep.subr.mxu0 0.0
      %2168 = vmatpush2.msra.mxu0 0.0
      %2169 = vmatprep.subr.mxu0 0.0
      %2170 = vmatpush2.msra.mxu0 0.0
      %2171 = vmatprep.subr.mxu0 0.0
      %2172 = vmatpush2.msra.mxu0 0.0
      %2173 = vmatprep.subr.mxu0 0.0
      %2174 = vmatpush2.msra.mxu0 0.0
      %2175 = vmatprep.subr.mxu0 0.0
      %2176 = vmatpush2.msra.mxu0 0.0
      %2177 = vmatprep.subr.mxu0 0.0
      %2178 = vmatpush2.msra.mxu0 0.0
      %2179 = vmatprep.subr.mxu0 0.0
      %2180 = vmatpush2.msra.mxu0 0.0
      %2181 = vmatprep.subr.mxu0 0.0
      %2182 = vmatpush2.msra.mxu0 0.0
      %2183 = vmatprep.subr.mxu0 0.0
      %2184 = vmatpush2.msra.mxu0 0.0
      %2185 = vmatprep.subr.mxu0 0.0
      %2186 = vmatpush2.msra.mxu0 0.0
      %2187 = vmatprep.subr.mxu0 0.0
      %2188 = vmatpush2.msra.mxu0 0.0
      %2189 = vmatprep.subr.mxu0 0.0
      %2190 = vmatpush2.msra.mxu0 0.0
      %2191 = vmatprep.mubr.f32.mxu0 0.0
      %2192 = vmatmul.mubr.f32.gmra.mxu0 %v497
      %v2193 = vpop.f32.mrf.mxu0
      %v2194 = vadd.f32 %v2125, %v2193
      %v2195 = vpop.f32.mrf.mxu0
      %2196 = vdwg.mxu0
      %v2197 = vxor.u32 %v2194, 2147483648
      %v2198 = vmul.f32 %v2197, 1.442695
      %v2199 = vpow.pop %v2198
      %v2200 = vadd.f32 %v2199, 1.0
      %v2201 = vrcp.pop %v2200
      %v2202 = vmul.f32 1.0, %v2201
      %v2207 = vsel %vm310, %v2041, %v2004
      %v2208 = vsel %vm312, %v2078, %v2207
      %v2209 = vsel %vm314, %v2115, %v2208
      %v2211 = vmul.f32 %v2202, %v2209
      %s2212 = smul.u32 %s478, 4
      %s2213 = scalar_lea.vmem %s2, %s2212
      %v2214 = vld [vmem:[%s2213] sm:$0xf]
      %v2215 = vld [vmem:[%s14] sm:$0xff]
      %v2216 = vld [vmem:[%s14 + $0x8] sm:$0xff]
      %v2217 = vld [vmem:[%s14 + $0x10] sm:$0xff]
      %v2218 = vld [vmem:[%s14 + $0x18] sm:$0xff]
      %v2220 = vsel %vm142, %v2211, 0
      %2222 = vmatprep.subr.mxu0 0.0
      %2223 = vmatpush1.msra.mxu0 0.0
      %2224 = vmatprep.subr.mxu0 0.0
      %2225 = vmatpush1.msra.mxu0 0.0
      %2226 = vmatprep.subr.mxu0 0.0
      %2227 = vmatpush1.msra.mxu0 0.0
      %2228 = vmatprep.subr.mxu0 0.0
      %2229 = vmatpush1.msra.mxu0 0.0
      %2230 = vmatprep.subr.mxu0 0.0
      %2231 = vmatpush1.msra.mxu0 0.0
      %2232 = vmatprep.subr.mxu0 0.0
      %2233 = vmatpush1.msra.mxu0 0.0
      %2234 = vmatprep.subr.mxu0 0.0
      %2235 = vmatpush1.msra.mxu0 0.0
      %2236 = vmatprep.subr.mxu0 0.0
      %2237 = vmatpush1.msra.mxu0 0.0
      %2238 = vmatprep.subr.mxu0 0.0
      %2239 = vmatpush1.msra.mxu0 0.0
      %2240 = vmatprep.subr.mxu0 0.0
      %2241 = vmatpush1.msra.mxu0 0.0
      %2242 = vmatprep.subr.mxu0 0.0
      %2243 = vmatpush1.msra.mxu0 0.0
      %2244 = vmatprep.subr.mxu0 0.0
      %2245 = vmatpush1.msra.mxu0 0.0
      %2246 = vmatprep.subr.mxu0 0.0
      %2247 = vmatpush1.msra.mxu0 %v2218
      %2248 = vmatprep.subr.mxu0 0.0
      %2249 = vmatpush1.msra.mxu0 %v2217
      %2250 = vmatprep.subr.mxu0 0.0
      %2251 = vmatpush1.msra.mxu0 %v2216
      %2252 = vmatprep.subr.mxu0 0.0
      %2253 = vmatpush1.msra.mxu0 %v2215
      %2254 = vmatprep.subr.mxu0 0.0
      %2255 = vmatpush2.msra.mxu0 0.0
      %2256 = vmatprep.subr.mxu0 0.0
      %2257 = vmatpush2.msra.mxu0 0.0
      %2258 = vmatprep.subr.mxu0 0.0
      %2259 = vmatpush2.msra.mxu0 0.0
      %2260 = vmatprep.subr.mxu0 0.0
      %2261 = vmatpush2.msra.mxu0 0.0
      %2262 = vmatprep.subr.mxu0 0.0
      %2263 = vmatpush2.msra.mxu0 0.0
      %2264 = vmatprep.subr.mxu0 0.0
      %2265 = vmatpush2.msra.mxu0 0.0
      %2266 = vmatprep.subr.mxu0 0.0
      %2267 = vmatpush2.msra.mxu0 0.0
      %2268 = vmatprep.subr.mxu0 0.0
      %2269 = vmatpush2.msra.mxu0 0.0
      %2270 = vmatprep.subr.mxu0 0.0
      %2271 = vmatpush2.msra.mxu0 0.0
      %2272 = vmatprep.subr.mxu0 0.0
      %2273 = vmatpush2.msra.mxu0 0.0
      %2274 = vmatprep.subr.mxu0 0.0
      %2275 = vmatpush2.msra.mxu0 0.0
      %2276 = vmatprep.subr.mxu0 0.0
      %2277 = vmatpush2.msra.mxu0 0.0
      %2278 = vmatprep.subr.mxu0 0.0
      %2279 = vmatpush2.msra.mxu0 0.0
      %2280 = vmatprep.subr.mxu0 0.0
      %2281 = vmatpush2.msra.mxu0 0.0
      %2282 = vmatprep.subr.mxu0 0.0
      %2283 = vmatpush2.msra.mxu0 0.0
      %2284 = vmatprep.subr.mxu0 0.0
      %2285 = vmatpush2.msra.mxu0 0.0
      %2286 = vmatprep.mubr.f32.mxu0 0.0
      %2287 = vmatmul.mubr.f32.gmra.mxu0 %v2220
      %v2288 = vpop.f32.mrf.mxu0
      %v2289 = vadd.f32 0.0, %v2288
      %v2290 = vpop.f32.mrf.mxu0
      %2291 = vdwg.mxu0
      %v2292 = vadd.f32 %v2214, %v2289
      %v2293 = vld [vmem:[%s15] sm:$0xff]
      %v2294 = vld [vmem:[%s15 + $0x8] sm:$0xff]
      %v2295 = vld [vmem:[%s15 + $0x10] sm:$0xff]
      %v2296 = vld [vmem:[%s15 + $0x18] sm:$0xff]
      %2297 = vmatprep.subr.mxu0 0.0
      %2298 = vmatpush1.msra.mxu0 0.0
      %2299 = vmatprep.subr.mxu0 0.0
      %2300 = vmatpush1.msra.mxu0 0.0
      %2301 = vmatprep.subr.mxu0 0.0
      %2302 = vmatpush1.msra.mxu0 0.0
      %2303 = vmatprep.subr.mxu0 0.0
      %2304 = vmatpush1.msra.mxu0 0.0
      %2305 = vmatprep.subr.mxu0 0.0
      %2306 = vmatpush1.msra.mxu0 0.0
      %2307 = vmatprep.subr.mxu0 0.0
      %2308 = vmatpush1.msra.mxu0 0.0
      %2309 = vmatprep.subr.mxu0 0.0
      %2310 = vmatpush1.msra.mxu0 0.0
      %2311 = vmatprep.subr.mxu0 0.0
      %2312 = vmatpush1.msra.mxu0 0.0
      %2313 = vmatprep.subr.mxu0 0.0
      %2314 = vmatpush1.msra.mxu0 0.0
      %2315 = vmatprep.subr.mxu0 0.0
      %2316 = vmatpush1.msra.mxu0 0.0
      %2317 = vmatprep.subr.mxu0 0.0
      %2318 = vmatpush1.msra.mxu0 0.0
      %2319 = vmatprep.subr.mxu0 0.0
      %2320 = vmatpush1.msra.mxu0 0.0
      %2321 = vmatprep.subr.mxu0 0.0
      %2322 = vmatpush1.msra.mxu0 %v2296
      %2323 = vmatprep.subr.mxu0 0.0
      %2324 = vmatpush1.msra.mxu0 %v2295
      %2325 = vmatprep.subr.mxu0 0.0
      %2326 = vmatpush1.msra.mxu0 %v2294
      %2327 = vmatprep.subr.mxu0 0.0
      %2328 = vmatpush1.msra.mxu0 %v2293
      %2329 = vmatprep.subr.mxu0 0.0
      %2330 = vmatpush2.msra.mxu0 0.0
      %2331 = vmatprep.subr.mxu0 0.0
      %2332 = vmatpush2.msra.mxu0 0.0
      %2333 = vmatprep.subr.mxu0 0.0
      %2334 = vmatpush2.msra.mxu0 0.0
      %2335 = vmatprep.subr.mxu0 0.0
      %2336 = vmatpush2.msra.mxu0 0.0
      %2337 = vmatprep.subr.mxu0 0.0
      %2338 = vmatpush2.msra.mxu0 0.0
      %2339 = vmatprep.subr.mxu0 0.0
      %2340 = vmatpush2.msra.mxu0 0.0
      %2341 = vmatprep.subr.mxu0 0.0
      %2342 = vmatpush2.msra.mxu0 0.0
      %2343 = vmatprep.subr.mxu0 0.0
      %2344 = vmatpush2.msra.mxu0 0.0
      %2345 = vmatprep.subr.mxu0 0.0
      %2346 = vmatpush2.msra.mxu0 0.0
      %2347 = vmatprep.subr.mxu0 0.0
      %2348 = vmatpush2.msra.mxu0 0.0
      %2349 = vmatprep.subr.mxu0 0.0
      %2350 = vmatpush2.msra.mxu0 0.0
      %2351 = vmatprep.subr.mxu0 0.0
      %2352 = vmatpush2.msra.mxu0 0.0
      %2353 = vmatprep.subr.mxu0 0.0
      %2354 = vmatpush2.msra.mxu0 0.0
      %2355 = vmatprep.subr.mxu0 0.0
      %2356 = vmatpush2.msra.mxu0 0.0
      %2357 = vmatprep.subr.mxu0 0.0
      %2358 = vmatpush2.msra.mxu0 0.0
      %2359 = vmatprep.subr.mxu0 0.0
      %2360 = vmatpush2.msra.mxu0 0.0
      %2361 = vmatprep.mubr.f32.mxu0 0.0
      %2362 = vmatmul.mubr.f32.gmra.mxu0 %v497
      %v2363 = vpop.f32.mrf.mxu0
      %v2364 = vadd.f32 0.0, %v2363
      %v2365 = vpop.f32.mrf.mxu0
      %2366 = vdwg.mxu0
      %v2367 = vadd.f32 %v2292, %v2364
      %v2368 = vxor.u32 %v2367, 2147483648
      %v2369 = vmul.f32 %v2368, 1.442695
      %v2370 = vpow.pop %v2369
      %v2371 = vadd.f32 %v2370, 1.0
      %v2372 = vrcp.pop %v2371
      %v2373 = vmul.f32 1.0, %v2372
      %v2374 = vtanh.pop %v2367
      %2376 = vrot.lane.b32.xlu0 %v484, 32
      %v2377 = vpop.permute.xlu0 %2376
      %v2379 = vmul.f32 %v2373, %v2377
      %2381 = vrot.lane.b32.xlu0 %v2374, 64
      %v2382 = vpop.permute.xlu0 %2381
      %v2384 = vmul.f32 %v2373, %v2382
      %2386 = vrot.lane.b32.xlu0 %v2384, 32
      %v2387 = vpop.permute.xlu0 %2386
      %v2389 = vadd.f32 %v2379, %v2387
      %v2390 = vtanh.pop %v2389
      %2392 = vrot.lane.b32.xlu0 %v2390, 64
      %v2393 = vpop.permute.xlu0 %2392
      %v2395 = vmul.f32 %v2373, %v2393
      %v2396 = vld [vmem:[%s16] sm:$0xff]
      %v2397 = vld [vmem:[%s16 + $0x8] sm:$0xff]
      %v2398 = vld [vmem:[%s16 + $0x10] sm:$0xff]
      %v2399 = vld [vmem:[%s16 + $0x18] sm:$0xff]
      %v2400 = vld [vmem:[%s17] sm:$0x1]
      %v2402 = vlaneseq
      %v2403 = vshrl.u32 %v2402, 7
      %v2404 = vsub.s32 0, %v2403
      %v2405 = vrot.slane %v2400, %v2404
      %2408 = vrot.lane.b32.xlu0 %v2395, 32
      %v2409 = vpop.permute.xlu0 %2408
      %v2410 = vsel %vm142, %v2409, 0
      %2412 = vmatprep.subr.mxu0 0.0
      %2413 = vmatpush1.msra.mxu0 0.0
      %2414 = vmatprep.subr.mxu0 0.0
      %2415 = vmatpush1.msra.mxu0 0.0
      %2416 = vmatprep.subr.mxu0 0.0
      %2417 = vmatpush1.msra.mxu0 0.0
      %2418 = vmatprep.subr.mxu0 0.0
      %2419 = vmatpush1.msra.mxu0 0.0
      %2420 = vmatprep.subr.mxu0 0.0
      %2421 = vmatpush1.msra.mxu0 0.0
      %2422 = vmatprep.subr.mxu0 0.0
      %2423 = vmatpush1.msra.mxu0 0.0
      %2424 = vmatprep.subr.mxu0 0.0
      %2425 = vmatpush1.msra.mxu0 0.0
      %2426 = vmatprep.subr.mxu0 0.0
      %2427 = vmatpush1.msra.mxu0 0.0
      %2428 = vmatprep.subr.mxu0 0.0
      %2429 = vmatpush1.msra.mxu0 0.0
      %2430 = vmatprep.subr.mxu0 0.0
      %2431 = vmatpush1.msra.mxu0 0.0
      %2432 = vmatprep.subr.mxu0 0.0
      %2433 = vmatpush1.msra.mxu0 0.0
      %2434 = vmatprep.subr.mxu0 0.0
      %2435 = vmatpush1.msra.mxu0 0.0
      %2436 = vmatprep.subr.mxu0 0.0
      %2437 = vmatpush1.msra.mxu0 %v2399
      %2438 = vmatprep.subr.mxu0 0.0
      %2439 = vmatpush1.msra.mxu0 %v2398
      %2440 = vmatprep.subr.mxu0 0.0
      %2441 = vmatpush1.msra.mxu0 %v2397
      %2442 = vmatprep.subr.mxu0 0.0
      %2443 = vmatpush1.msra.mxu0 %v2396
      %2444 = vmatprep.subr.mxu0 0.0
      %2445 = vmatpush2.msra.mxu0 0.0
      %2446 = vmatprep.subr.mxu0 0.0
      %2447 = vmatpush2.msra.mxu0 0.0
      %2448 = vmatprep.subr.mxu0 0.0
      %2449 = vmatpush2.msra.mxu0 0.0
      %2450 = vmatprep.subr.mxu0 0.0
      %2451 = vmatpush2.msra.mxu0 0.0
      %2452 = vmatprep.subr.mxu0 0.0
      %2453 = vmatpush2.msra.mxu0 0.0
      %2454 = vmatprep.subr.mxu0 0.0
      %2455 = vmatpush2.msra.mxu0 0.0
      %2456 = vmatprep.subr.mxu0 0.0
      %2457 = vmatpush2.msra.mxu0 0.0
      %2458 = vmatprep.subr.mxu0 0.0
      %2459 = vmatpush2.msra.mxu0 0.0
      %2460 = vmatprep.subr.mxu0 0.0
      %2461 = vmatpush2.msra.mxu0 0.0
      %2462 = vmatprep.subr.mxu0 0.0
      %2463 = vmatpush2.msra.mxu0 0.0
      %2464 = vmatprep.subr.mxu0 0.0
      %2465 = vmatpush2.msra.mxu0 0.0
      %2466 = vmatprep.subr.mxu0 0.0
      %2467 = vmatpush2.msra.mxu0 0.0
      %2468 = vmatprep.subr.mxu0 0.0
      %2469 = vmatpush2.msra.mxu0 0.0
      %2470 = vmatprep.subr.mxu0 0.0
      %2471 = vmatpush2.msra.mxu0 0.0
      %2472 = vmatprep.subr.mxu0 0.0
      %2473 = vmatpush2.msra.mxu0 0.0
      %2474 = vmatprep.subr.mxu0 0.0
      %2475 = vmatpush2.msra.mxu0 0.0
      %2476 = vmatprep.mubr.f32.mxu0 0.0
      %2477 = vmatmul.mubr.f32.gmra.mxu0 %v2410
      %v2478 = vpop.f32.mrf.mxu0
      %v2479 = vadd.f32 %v2405, %v2478
      %v2480 = vpop.f32.mrf.mxu0
      %2481 = vdwg.mxu0
      %s2482 = sld [smem:[#allocation5 + %s478]]
      %v2483 = vstv %s2482
      %vm2484 = vcmp.lt.s32.totalorder %v473, %v2483
      %v2485 = vsel %vm2484, 1, 0
      %vm2486 = vcmp.eq.s32.totalorder %v2485, 1
      %v2487 = vsel %vm2486, %v2479, 0.0
      %s2488 = scalar_lea.vmem [#allocation8], %s2212
      %2489 = vst [vmem:[%s2488] sm:$0xf] %v2487
      %v2490 = vsel %vm2486, %v1571, 0.0
      %s2491 = scalar_lea.vmem [#allocation9], %s2212
      %2492 = vst [vmem:[%s2491] sm:$0xf] %v2490
      %2494 = vst.msk [vmem:[#allocation2] sm:$0xf] %vm388, %v2409
      %2496 = vrot.lane.b32.xlu0 %v2389, 96
      %v2497 = vpop.permute.xlu0 %2496
      %2499 = vst.msk [vmem:[#allocation3] sm:$0xf] %vm388, %v2497
    $region82: #{tpu_custom_call.1} parent=1 // loop_footer
      %s482 = sadd.s32 1, %s478
    $region83: #{tpu_custom_call.1} parent=1 // loop_footer_branch
      %477 = sbr.rel target = $region79
    $region84: #{tpu_custom_call.1} parent=1 // loop_exit
      _
    // Predicated region
    $region85: #{tpu_custom_call.1} parent=1 // pred_check
      _
    $region86: #{tpu_custom_call.1} parent=1 // pred_check_branch
      %2501 = sbr.rel (0) target = $region88
    $region87: #{tpu_custom_call.1} parent=1 // pred_region
      %s2503 = ssub.s32 448, 448
      %2504 = vsyncadd [#allocation6], %s2503
      %s2505 = sshll.u32 [#allocation8], 4
      %s2506 = int_to_ptr.vmem [resolvable:$true] %s2505
      %2511 = dma.vmem_to_hbm [thread:$0]  %s2506, 448, %s18, [#allocation6], 64, 64, 4
    $region88: #{tpu_custom_call.1} parent=1 // pred_fallthru
      _
    // Predicated region
    $region89: #{tpu_custom_call.1} parent=1 // pred_check
      _
    $region90: #{tpu_custom_call.1} parent=1 // pred_check_branch
      %2513 = sbr.rel (0) target = $region92
    $region91: #{tpu_custom_call.1} parent=1 // pred_region
      %s2515 = ssub.s32 448, 448
      %2516 = vsyncadd [#allocation10], %s2515
      %s2517 = sshll.u32 [#allocation9], 4
      %s2518 = int_to_ptr.vmem [resolvable:$true] %s2517
      %2523 = dma.vmem_to_hbm [thread:$0]  %s2518, 448, %s19, [#allocation10], 64, 64, 4
    $region92: #{tpu_custom_call.1} parent=1 // pred_fallthru
      _
    // Predicated region
    $region93: #{tpu_custom_call.1} parent=1 // pred_check
      _
    $region94: #{tpu_custom_call.1} parent=1 // pred_check_branch
      %2525 = sbr.rel (0) target = $region96
    $region95: #{tpu_custom_call.1} parent=1 // pred_region
      %2526 = dma.done [#allocation6], 448
    $region96: #{tpu_custom_call.1} parent=1 // pred_fallthru
      _
    // Predicated region
    $region97: #{tpu_custom_call.1} parent=1 // pred_check
      _
    $region98: #{tpu_custom_call.1} parent=1 // pred_check_branch
      %2528 = sbr.rel (0) target = $region100
    $region99: #{tpu_custom_call.1} parent=1 // pred_region
      %2529 = dma.done [#allocation10], 448
    $region100: #{tpu_custom_call.1} parent=1 // pred_fallthru
      _
    %2530 = vsyncpa [#allocation6], 1
    %2531 = vsyncpa [#allocation10], 1
    %2532 = vsyncpa [#allocation7], 1

</llo_original>
